<compile_context>
chip_gen: v7x
topology: tpu7x:2x2x1
jax: 0.10.0
libtpu: 0.0.40
codegen_flags: <defaults>
</compile_context>

<pallas_src>
import functools

import jax
import jax.numpy as jnp
from jax.experimental import pallas as pl
from jax.experimental.pallas import tpu as pltpu

# ------------------------------------------------------------------ config ---
T_LEN = 16          # sequence length
N_PHONEME = 45
N_SPEAKER = 10
PH_EMB = 8
SPK_EMB = 7
D_IN = 1 + PH_EMB + SPK_EMB     # 16  (f0 | phoneme emb | speaker emb)
HIDDEN = 32
FFN = 64
OUT = 2
POSTNET_CH = 16
KSIZE = 5
PAD = KSIZE // 2
LANES = 128
N_PH_PAD = 48       # phoneme table rows padded to a multiple of 8
N_SPK_PAD = 16      # speaker table rows padded to a multiple of 8
ATT_SCALE = 1.0 / float(HIDDEN) ** 0.5


# --------------------------------------------------- packed weight-slab map --
def _make_layout():
    """Every tensor lives at an 8-row-aligned offset in one (ROWS, 128) slab."""
    entries = [
        ("t_ph", N_PH_PAD, HIDDEN),                 # phoneme_emb @ pre_w_ph
        ("t_spk", N_SPK_PAD, HIDDEN),               # speaker_emb @ pre_w_spk
        ("w_f0", 1, HIDDEN), ("b_pre", 1, HIDDEN),
        ("wq", HIDDEN, HIDDEN), ("bq", 1, HIDDEN),  # ln1 + 1/sqrt(H) folded in
        ("wk", HIDDEN, HIDDEN), ("bk", 1, HIDDEN),  # ln1 folded in
        ("wv", HIDDEN, HIDDEN), ("bv", 1, HIDDEN),  # ln1 folded in
        ("wo", HIDDEN, HIDDEN), ("bo", 1, HIDDEN),
        ("wf1", HIDDEN, FFN), ("bf1", 1, FFN),      # ln2 folded in
        ("wf2", FFN, HIDDEN), ("bf2", 1, HIDDEN),
        ("wpost", HIDDEN, OUT), ("bpost", 1, OUT),  # lnf folded in
        ("wc1", OUT, KSIZE * POSTNET_CH), ("bc1", 1, POSTNET_CH),
        ("wc2", POSTNET_CH, KSIZE * POSTNET_CH), ("bc2", 1, POSTNET_CH),
        ("wc3", POSTNET_CH, KSIZE * OUT), ("bc3", 1, OUT),
    ]
    layout, off = {}, 0
    for name, r, c in entries:
        layout[name] = (off, r, c)
        off += ((r + 7) // 8) * 8
    return layout, off


_LAYOUT, _SLAB_ROWS = _make_layout()                # 456 rows x 128 lanes f32


# --------------------------------------------------------------- blockspecs --
def _zeros_idx(nd, i):
    return (0,) * nd


def _fs(shape):
    """Full-array BlockSpec (block == whole array) for grid=(1,)."""
    return pl.BlockSpec(shape, functools.partial(_zeros_idx, len(shape)))


# ------------------------------------------------------------- fused kernel --
def _fused_kernel(f0_ref, ph_ref, spk_ref, slab_ref, out_ref):
    f32 = jnp.float32
    t = f0_ref.shape[0]

    def rd(name):                                   # static slab slice (free)
        off, r, c = _LAYOUT[name]
        return slab_ref[off:off + r, :c]

    def mm(a, b):
        return jnp.dot(a, b, preferred_element_type=f32)

    def lnorm(x, eps=1e-5):                         # affine folded into weights
        mu = jnp.mean(x, axis=-1, keepdims=True)
        xc = x - mu
        var = jnp.mean(xc * xc, axis=-1, keepdims=True)
        return xc * jax.lax.rsqrt(var + eps)

    # ---- embeddings folded into `pre`: one-hot matmuls against tables -------
    ph_onehot = (jax.lax.broadcasted_iota(jnp.int32, (t, N_PH_PAD), 1)
                 == ph_ref[...]).astype(f32)                        # (T, 48)
    spk_onehot = (jax.lax.broadcasted_iota(jnp.int32, (1, N_SPK_PAD), 1)
                  == spk_ref[0]).astype(f32)                        # (1, 16)

    h = (f0_ref[...] * rd("w_f0")                   # (T,1)*(1,H) outer product
         + mm(ph_onehot, rd("t_ph"))                # (T,H)
         + mm(spk_onehot, rd("t_spk"))              # (1,H) broadcast over T
         + rd("b_pre"))                                              # (T, H)

    # ---- encoder: one pre-LN transformer block (mask == ones -> no-op) ------
    a = lnorm(h)
    q = mm(a, rd("wq")) + rd("bq")                  # scale + ln1 pre-folded
    k = mm(a, rd("wk")) + rd("bk")
    v = mm(a, rd("wv")) + rd("bv")
    s = jax.lax.dot_general(q, k, (((1,), (1,)), ((), ())),
                            preferred_element_type=f32)             # (T, T)
    s = s - jnp.max(s, axis=-1, keepdims=True)
    p = jnp.exp(s)
    p = p * pl.reciprocal(jnp.sum(p, axis=-1, keepdims=True), approx=True)
    h = h + mm(mm(p, v), rd("wo")) + rd("bo")

    f = lnorm(h)
    f = jnp.maximum(mm(f, rd("wf1")) + rd("bf1"), 0.0)
    h = h + mm(f, rd("wf2")) + rd("bf2")

    # ---- post linear (lnf folded into wpost/bpost) --------------------------
    out1 = mm(lnorm(h), rd("wpost")) + rd("bpost")                   # (T, 2)

    # ---- postnet: Conv1d(k=5, pad=2) fully in vregs (roll + halo mask) ------
    def conv_same(x, wname, bname, cout, use_tanh):
        # P[tau, k*cout + co] = sum_ci x[tau, ci] * w[k, ci, co]
        p_all = mm(x, rd(wname))                                     # (T, K*cout)
        row = jax.lax.broadcasted_iota(jnp.int32, (t, cout), 0)
        acc = p_all[:, PAD * cout:(PAD + 1) * cout] + rd(bname)      # centre tap
        for ktap in range(KSIZE):                                    # static unroll
            if ktap == PAD:
                continue
            sh = PAD - ktap                                          # static shift
            tap = p_all[:, ktap * cout:(ktap + 1) * cout]            # (T, cout)
            tap = pltpu.roll(tap, shift=sh % t, axis=0)              # XLU sublane roll
            halo = (row >= sh) & (row < t + sh)                      # zero rolled-in rows
            acc = acc + jnp.where(halo, tap, 0.0)
        return jnp.tanh(acc) if use_tanh else acc

    x = conv_same(out1, "wc1", "bc1", POSTNET_CH, True)
    x = conv_same(x, "wc2", "bc2", POSTNET_CH, True)
    x = conv_same(x, "wc3", "bc3", OUT, False)

    out_ref[...] = out1 + x                                          # (T, 2)


# ----------------------------------------------------------------- forward ---
def yukarin_sosf_forward(weight_slab, f0_discrete, phoneme, speaker_id):
    """f0_discrete: (T, 1) f32 ; phoneme: (T,) i32 ; speaker_id: (1,) i32."""
    t = f0_discrete.shape[0]
    ph_ids = phoneme.reshape(t, 1).astype(jnp.int32)
    spk_id = speaker_id.reshape(1).astype(jnp.int32)

    out2 = pl.pallas_call(
        _fused_kernel,
        out_shape=jax.ShapeDtypeStruct((t, OUT), jnp.float32),
        grid=(1,),
        in_specs=[
            _fs(f0_discrete.shape),
            _fs(ph_ids.shape),
            pl.BlockSpec(memory_space=pltpu.MemorySpace.SMEM),   # speaker id scalar
            _fs(weight_slab.shape),                              # single packed slab
        ],
        out_specs=_fs((t, OUT)),
        compiler_params=pltpu.CompilerParams(
            dimension_semantics=("arbitrary",)),
    )(f0_discrete, ph_ids, spk_id, weight_slab)

    f0_contour = out2[:, 0]
    voiced = out2[:, 1]
    return f0_contour, voiced


# ------------------------------------------------------------------ params ---
def make_params(key):
    ks = jax.random.split(key, 32)
    n = iter(range(32))

    def w(shape, scale=0.1):
        return (scale * jax.random.normal(ks[next(n)], shape)).astype(jnp.float32)

    return {
        "phoneme_emb": w((N_PHONEME, PH_EMB)),
        "speaker_emb": w((N_SPEAKER, SPK_EMB)),
        "pre_w": w((D_IN, HIDDEN)), "pre_b": w((1, HIDDEN)),
        "ln1_g": jnp.ones((1, HIDDEN), jnp.float32), "ln1_b": jnp.zeros((1, HIDDEN), jnp.float32),
        "ln2_g": jnp.ones((1, HIDDEN), jnp.float32), "ln2_b": jnp.zeros((1, HIDDEN), jnp.float32),
        "lnf_g": jnp.ones((1, HIDDEN), jnp.float32), "lnf_b": jnp.zeros((1, HIDDEN), jnp.float32),
        "attn": {
            "wq": w((HIDDEN, HIDDEN)), "bq": w((1, HIDDEN)),
            "wk": w((HIDDEN, HIDDEN)), "bk": w((1, HIDDEN)),
            "wv": w((HIDDEN, HIDDEN)), "bv": w((1, HIDDEN)),
            "wo": w((HIDDEN, HIDDEN)), "bo": w((1, HIDDEN)),
        },
        "ffn1_w": w((HIDDEN, FFN)), "ffn1_b": w((1, FFN)),
        "ffn2_w": w((FFN, HIDDEN)), "ffn2_b": w((1, HIDDEN)),
        "post_w": w((HIDDEN, OUT)), "post_b": w((1, OUT)),
        # conv weights stored as (K, Cin, Cout) == torch (Cout, Cin, K) transposed
        "pn1_w": w((KSIZE, OUT, POSTNET_CH)), "pn1_b": w((1, POSTNET_CH)),
        "pn2_w": w((KSIZE, POSTNET_CH, POSTNET_CH)), "pn2_b": w((1, POSTNET_CH)),
        "pn3_w": w((KSIZE, POSTNET_CH, OUT)), "pn3_b": w((1, OUT)),
    }


def pack_params(raw):
    """One-time host-side repack into ONE 8-row-aligned (ROWS, 128) f32 slab.

    Folds: embeddings into `pre`, LN affines into the following matmuls,
    attention scale into wq/bq, conv weights flattened tap-major (cin, K*cout).
    All transformations are exact algebraic refactors of the forward pass.
    """
    a = raw["attn"]
    pre_w = raw["pre_w"]
    g1 = raw["ln1_g"].reshape(HIDDEN, 1)
    b1 = raw["ln1_b"]
    g2 = raw["ln2_g"].reshape(HIDDEN, 1)
    b2 = raw["ln2_b"]
    gf = raw["lnf_g"].reshape(HIDDEN, 1)
    bf = raw["lnf_b"]

    def conv_flat(w):                      # (K, Cin, Cout) -> (Cin, K*Cout), tap-major
        k, cin, cout = w.shape
        return jnp.transpose(w, (1, 0, 2)).reshape(cin, k * cout)

    tensors = {
        "t_ph": raw["phoneme_emb"] @ pre_w[1:1 + PH_EMB],
        "t_spk": raw["speaker_emb"] @ pre_w[1 + PH_EMB:],
        "w_f0": pre_w[:1],
        "b_pre": raw["pre_b"],
        "wq": (g1 * a["wq"]) * ATT_SCALE, "bq": (b1 @ a["wq"] + a["bq"]) * ATT_SCALE,
        "wk": g1 * a["wk"], "bk": b1 @ a["wk"] + a["bk"],
        "wv": g1 * a["wv"], "bv": b1 @ a["wv"] + a["bv"],
        "wo": a["wo"], "bo": a["bo"],
        "wf1": g2 * raw["ffn1_w"], "bf1": b2 @ raw["ffn1_w"] + raw["ffn1_b"],
        "wf2": raw["ffn2_w"], "bf2": raw["ffn2_b"],
        "wpost": gf * raw["post_w"], "bpost": bf @ raw["post_w"] + raw["post_b"],
        "wc1": conv_flat(raw["pn1_w"]), "bc1": raw["pn1_b"],
        "wc2": conv_flat(raw["pn2_w"]), "bc2": raw["pn2_b"],
        "wc3": conv_flat(raw["pn3_w"]), "bc3": raw["pn3_b"],
    }

    slab = jnp.zeros((_SLAB_ROWS, LANES), jnp.float32)
    for name, arr in tensors.items():
        off, r, c = _LAYOUT[name]
        arr = jnp.asarray(arr, jnp.float32)
        ar, ac = arr.shape
        assert ar <= r and ac <= c and c <= LANES, (name, arr.shape, (r, c))
        slab = slab.at[off:off + ar, :ac].set(arr)
    return slab


# -------------------------------------------------------------------- main ---
if __name__ == "__main__":
    key = jax.random.PRNGKey(0)
    kp, k1, k2, k3 = jax.random.split(key, 4)

    weight_slab = pack_params(make_params(kp))
    f0_discrete = jax.random.normal(k1, (T_LEN, 1), dtype=jnp.float32)
    phoneme = jax.random.randint(k2, (T_LEN,), 0, N_PHONEME, dtype=jnp.int32)
    speaker_id = jax.random.randint(k3, (1,), 0, N_SPEAKER, dtype=jnp.int32)

    fwd = jax.jit(yukarin_sosf_forward)
    f0_contour, voiced = fwd(weight_slab, f0_discrete, phoneme, speaker_id)
    jax.block_until_ready((f0_contour, voiced))

    assert f0_contour.shape == (T_LEN,) and voiced.shape == (T_LEN,)
    assert f0_contour.dtype == jnp.float32 and voiced.dtype == jnp.float32
    print("KERNEL_OK")
</pallas_src>

<mosaic_0001>
module attributes {stable_mosaic.version = 11 : i64} {
  func.func @_fused_kernel(%arg0: i32, %arg1: memref<16x1xf32, #tpu.memory_space<vmem>>, %arg2: memref<16x1xi32, #tpu.memory_space<vmem>>, %arg3: memref<1xi32, #tpu.memory_space<smem>>, %arg4: memref<456x128xf32, #tpu.memory_space<vmem>>, %arg5: memref<16x2xf32, #tpu.memory_space<vmem>>) attributes {dimension_semantics = [#tpu.dimension_semantics<arbitrary>], iteration_bounds = array<i64: 1>, scalar_prefetch = 0 : i64, scratch_operands = 0 : i64, tpu.core_type = #tpu.core_type<tc>, window_params = [{pipeline_mode = #tpu.pipeline_mode<synchronous>, transform_indices = @transform_0, window_bounds = array<i64: 16, 1>}, {pipeline_mode = #tpu.pipeline_mode<synchronous>, transform_indices = @transform_1, window_bounds = array<i64: 16, 1>}, {transform_indices = @transform_2, window_bounds = array<i64: 1>}, {pipeline_mode = #tpu.pipeline_mode<synchronous>, transform_indices = @transform_3, window_bounds = array<i64: 456, 128>}, {pipeline_mode = #tpu.pipeline_mode<synchronous>, transform_indices = @transform_4, window_bounds = array<i64: 16, 2>}]} {
    %0 = tpu.iota {dimensions = array<i32: 1>} : vector<16x48xi32>
    %c0 = arith.constant 0 : index
    %c0_0 = arith.constant 0 : index
    %1 = vector.load %arg2[%c0, %c0_0] : memref<16x1xi32, #tpu.memory_space<vmem>>, vector<16x1xi32>
    %2 = vector.broadcast %1 : vector<16x1xi32> to vector<16x48xi32>
    %3 = arith.cmpi eq, %0, %2 : vector<16x48xi32>
    %4 = arith.extui %3 : vector<16x48xi1> to vector<16x48xi32>
    %5 = arith.sitofp %4 : vector<16x48xi32> to vector<16x48xf32>
    %6 = tpu.iota {dimensions = array<i32: 1>} : vector<1x16xi32>
    %c0_1 = arith.constant 0 : index
    %7 = memref.load %arg3[%c0_1] : memref<1xi32, #tpu.memory_space<smem>>
    %8 = vector.broadcast %7 : i32 to vector<1x16xi32>
    %9 = arith.cmpi eq, %6, %8 : vector<1x16xi32>
    %10 = arith.extui %9 : vector<1x16xi1> to vector<1x16xi32>
    %11 = arith.sitofp %10 : vector<1x16xi32> to vector<1x16xf32>
    %c0_2 = arith.constant 0 : index
    %c0_3 = arith.constant 0 : index
    %12 = vector.load %arg1[%c0_2, %c0_3] : memref<16x1xf32, #tpu.memory_space<vmem>>, vector<16x1xf32>
    %c64 = arith.constant 64 : index
    %c0_4 = arith.constant 0 : index
    %13 = vector.load %arg4[%c64, %c0_4] : memref<456x128xf32, #tpu.memory_space<vmem>>, vector<1x32xf32>
    %14 = vector.broadcast %12 : vector<16x1xf32> to vector<16x32xf32>
    %15 = vector.broadcast %13 : vector<1x32xf32> to vector<16x32xf32>
    %16 = arith.mulf %14, %15 : vector<16x32xf32>
    %c0_5 = arith.constant 0 : index
    %c0_6 = arith.constant 0 : index
    %17 = vector.load %arg4[%c0_5, %c0_6] : memref<456x128xf32, #tpu.memory_space<vmem>>, vector<48x32xf32>
    %cst = arith.constant dense<0.000000e+00> : vector<16x32xf32>
    %18 = tpu.matmul %5, %17, %cst {dimension_numbers = #tpu.dot_dimension_numbers<[1], [0], [0], [1], [0, 0, 1, 1], [], []>} : vector<16x48xf32>, vector<48x32xf32>, vector<16x32xf32> -> vector<16x32xf32>
    %19 = arith.addf %16, %18 : vector<16x32xf32>
    %c48 = arith.constant 48 : index
    %c0_7 = arith.constant 0 : index
    %20 = vector.load %arg4[%c48, %c0_7] : memref<456x128xf32, #tpu.memory_space<vmem>>, vector<16x32xf32>
    %cst_8 = arith.constant dense<0.000000e+00> : vector<1x32xf32>
    %21 = tpu.matmul %11, %20, %cst_8 {dimension_numbers = #tpu.dot_dimension_numbers<[1], [0], [0], [1], [0, 0, 1, 1], [], []>} : vector<1x16xf32>, vector<16x32xf32>, vector<1x32xf32> -> vector<1x32xf32>
    %22 = vector.broadcast %21 : vector<1x32xf32> to vector<16x32xf32>
    %23 = arith.addf %19, %22 : vector<16x32xf32>
    %c72 = arith.constant 72 : index
    %c0_9 = arith.constant 0 : index
    %24 = vector.load %arg4[%c72, %c0_9] : memref<456x128xf32, #tpu.memory_space<vmem>>, vector<1x32xf32>
    %25 = vector.broadcast %24 : vector<1x32xf32> to vector<16x32xf32>
    %26 = arith.addf %23, %25 : vector<16x32xf32>
    %cst_10 = arith.constant dense<0.000000e+00> : vector<16xf32>
    %27 = vector.multi_reduction <add>, %26, %cst_10 [1] : vector<16x32xf32> to vector<16xf32>
    %28 = vector.shape_cast %27 : vector<16xf32> to vector<16x1xf32>
    %cst_11 = arith.constant 3.200000e+01 : f32
    %29 = vector.broadcast %cst_11 : f32 to vector<16x1xf32>
    %30 = arith.divf %28, %29 : vector<16x1xf32>
    %31 = vector.broadcast %30 : vector<16x1xf32> to vector<16x32xf32>
    %32 = arith.subf %26, %31 : vector<16x32xf32>
    %33 = arith.mulf %32, %32 : vector<16x32xf32>
    %cst_12 = arith.constant dense<0.000000e+00> : vector<16xf32>
    %34 = vector.multi_reduction <add>, %33, %cst_12 [1] : vector<16x32xf32> to vector<16xf32>
    %35 = vector.shape_cast %34 : vector<16xf32> to vector<16x1xf32>
    %cst_13 = arith.constant 3.200000e+01 : f32
    %36 = vector.broadcast %cst_13 : f32 to vector<16x1xf32>
    %37 = arith.divf %35, %36 : vector<16x1xf32>
    %cst_14 = arith.constant 9.99999974E-6 : f32
    %38 = vector.broadcast %cst_14 : f32 to vector<16x1xf32>
    %39 = arith.addf %37, %38 : vector<16x1xf32>
    %40 = math.rsqrt %39 : vector<16x1xf32>
    %41 = vector.broadcast %40 : vector<16x1xf32> to vector<16x32xf32>
    %42 = arith.mulf %32, %41 : vector<16x32xf32>
    %c80 = arith.constant 80 : index
    %c0_15 = arith.constant 0 : index
    %43 = vector.load %arg4[%c80, %c0_15] : memref<456x128xf32, #tpu.memory_space<vmem>>, vector<32x32xf32>
    %cst_16 = arith.constant dense<0.000000e+00> : vector<16x32xf32>
    %44 = tpu.matmul %42, %43, %cst_16 {dimension_numbers = #tpu.dot_dimension_numbers<[1], [0], [0], [1], [0, 0, 1, 1], [], []>} : vector<16x32xf32>, vector<32x32xf32>, vector<16x32xf32> -> vector<16x32xf32>
    %c112 = arith.constant 112 : index
    %c0_17 = arith.constant 0 : index
    %45 = vector.load %arg4[%c112, %c0_17] : memref<456x128xf32, #tpu.memory_space<vmem>>, vector<1x32xf32>
    %46 = vector.broadcast %45 : vector<1x32xf32> to vector<16x32xf32>
    %47 = arith.addf %44, %46 : vector<16x32xf32>
    %c120 = arith.constant 120 : index
    %c0_18 = arith.constant 0 : index
    %48 = vector.load %arg4[%c120, %c0_18] : memref<456x128xf32, #tpu.memory_space<vmem>>, vector<32x32xf32>
    %cst_19 = arith.constant dense<0.000000e+00> : vector<16x32xf32>
    %49 = tpu.matmul %42, %48, %cst_19 {dimension_numbers = #tpu.dot_dimension_numbers<[1], [0], [0], [1], [0, 0, 1, 1], [], []>} : vector<16x32xf32>, vector<32x32xf32>, vector<16x32xf32> -> vector<16x32xf32>
    %c152 = arith.constant 152 : index
    %c0_20 = arith.constant 0 : index
    %50 = vector.load %arg4[%c152, %c0_20] : memref<456x128xf32, #tpu.memory_space<vmem>>, vector<1x32xf32>
    %51 = vector.broadcast %50 : vector<1x32xf32> to vector<16x32xf32>
    %52 = arith.addf %49, %51 : vector<16x32xf32>
    %c160 = arith.constant 160 : index
    %c0_21 = arith.constant 0 : index
    %53 = vector.load %arg4[%c160, %c0_21] : memref<456x128xf32, #tpu.memory_space<vmem>>, vector<32x32xf32>
    %cst_22 = arith.constant dense<0.000000e+00> : vector<16x32xf32>
    %54 = tpu.matmul %42, %53, %cst_22 {dimension_numbers = #tpu.dot_dimension_numbers<[1], [0], [0], [1], [0, 0, 1, 1], [], []>} : vector<16x32xf32>, vector<32x32xf32>, vector<16x32xf32> -> vector<16x32xf32>
    %c192 = arith.constant 192 : index
    %c0_23 = arith.constant 0 : index
    %55 = vector.load %arg4[%c192, %c0_23] : memref<456x128xf32, #tpu.memory_space<vmem>>, vector<1x32xf32>
    %56 = vector.broadcast %55 : vector<1x32xf32> to vector<16x32xf32>
    %57 = arith.addf %54, %56 : vector<16x32xf32>
    %cst_24 = arith.constant dense<0.000000e+00> : vector<16x16xf32>
    %58 = tpu.matmul %47, %52, %cst_24 {dimension_numbers = #tpu.dot_dimension_numbers<[1], [1], [0], [0], [0, 0, 1, 0], [], []>} : vector<16x32xf32>, vector<16x32xf32>, vector<16x16xf32> -> vector<16x16xf32>
    %cst_25 = arith.constant dense<0xFF800000> : vector<16xf32>
    %59 = vector.multi_reduction <maximumf>, %58, %cst_25 [1] : vector<16x16xf32> to vector<16xf32>
    %60 = vector.shape_cast %59 : vector<16xf32> to vector<16x1xf32>
    %61 = vector.broadcast %60 : vector<16x1xf32> to vector<16x16xf32>
    %62 = arith.subf %58, %61 : vector<16x16xf32>
    %63 = math.exp %62 : vector<16x16xf32>
    %cst_26 = arith.constant dense<0.000000e+00> : vector<16xf32>
    %64 = vector.multi_reduction <add>, %63, %cst_26 [1] : vector<16x16xf32> to vector<16xf32>
    %65 = vector.shape_cast %64 : vector<16xf32> to vector<16x1xf32>
    %66 = tpu.reciprocal %65 {approx = true} : vector<16x1xf32> -> vector<16x1xf32>
    %67 = vector.broadcast %66 : vector<16x1xf32> to vector<16x16xf32>
    %68 = arith.mulf %63, %67 : vector<16x16xf32>
    %cst_27 = arith.constant dense<0.000000e+00> : vector<16x32xf32>
    %69 = tpu.matmul %68, %57, %cst_27 {dimension_numbers = #tpu.dot_dimension_numbers<[1], [0], [0], [1], [0, 0, 1, 1], [], []>} : vector<16x16xf32>, vector<16x32xf32>, vector<16x32xf32> -> vector<16x32xf32>
    %c200 = arith.constant 200 : index
    %c0_28 = arith.constant 0 : index
    %70 = vector.load %arg4[%c200, %c0_28] : memref<456x128xf32, #tpu.memory_space<vmem>>, vector<32x32xf32>
    %cst_29 = arith.constant dense<0.000000e+00> : vector<16x32xf32>
    %71 = tpu.matmul %69, %70, %cst_29 {dimension_numbers = #tpu.dot_dimension_numbers<[1], [0], [0], [1], [0, 0, 1, 1], [], []>} : vector<16x32xf32>, vector<32x32xf32>, vector<16x32xf32> -> vector<16x32xf32>
    %72 = arith.addf %26, %71 : vector<16x32xf32>
    %c232 = arith.constant 232 : index
    %c0_30 = arith.constant 0 : index
    %73 = vector.load %arg4[%c232, %c0_30] : memref<456x128xf32, #tpu.memory_space<vmem>>, vector<1x32xf32>
    %74 = vector.broadcast %73 : vector<1x32xf32> to vector<16x32xf32>
    %75 = arith.addf %72, %74 : vector<16x32xf32>
    %cst_31 = arith.constant dense<0.000000e+00> : vector<16xf32>
    %76 = vector.multi_reduction <add>, %75, %cst_31 [1] : vector<16x32xf32> to vector<16xf32>
    %77 = vector.shape_cast %76 : vector<16xf32> to vector<16x1xf32>
    %cst_32 = arith.constant 3.200000e+01 : f32
    %78 = vector.broadcast %cst_32 : f32 to vector<16x1xf32>
    %79 = arith.divf %77, %78 : vector<16x1xf32>
    %80 = vector.broadcast %79 : vector<16x1xf32> to vector<16x32xf32>
    %81 = arith.subf %75, %80 : vector<16x32xf32>
    %82 = arith.mulf %81, %81 : vector<16x32xf32>
    %cst_33 = arith.constant dense<0.000000e+00> : vector<16xf32>
    %83 = vector.multi_reduction <add>, %82, %cst_33 [1] : vector<16x32xf32> to vector<16xf32>
    %84 = vector.shape_cast %83 : vector<16xf32> to vector<16x1xf32>
    %cst_34 = arith.constant 3.200000e+01 : f32
    %85 = vector.broadcast %cst_34 : f32 to vector<16x1xf32>
    %86 = arith.divf %84, %85 : vector<16x1xf32>
    %cst_35 = arith.constant 9.99999974E-6 : f32
    %87 = vector.broadcast %cst_35 : f32 to vector<16x1xf32>
    %88 = arith.addf %86, %87 : vector<16x1xf32>
    %89 = math.rsqrt %88 : vector<16x1xf32>
    %90 = vector.broadcast %89 : vector<16x1xf32> to vector<16x32xf32>
    %91 = arith.mulf %81, %90 : vector<16x32xf32>
    %c240 = arith.constant 240 : index
    %c0_36 = arith.constant 0 : index
    %92 = vector.load %arg4[%c240, %c0_36] : memref<456x128xf32, #tpu.memory_space<vmem>>, vector<32x64xf32>
    %cst_37 = arith.constant dense<0.000000e+00> : vector<16x64xf32>
    %93 = tpu.matmul %91, %92, %cst_37 {dimension_numbers = #tpu.dot_dimension_numbers<[1], [0], [0], [1], [0, 0, 1, 1], [], []>} : vector<16x32xf32>, vector<32x64xf32>, vector<16x64xf32> -> vector<16x64xf32>
    %c272 = arith.constant 272 : index
    %c0_38 = arith.constant 0 : index
    %94 = vector.load %arg4[%c272, %c0_38] : memref<456x128xf32, #tpu.memory_space<vmem>>, vector<1x64xf32>
    %95 = vector.broadcast %94 : vector<1x64xf32> to vector<16x64xf32>
    %96 = arith.addf %93, %95 : vector<16x64xf32>
    %cst_39 = arith.constant 0.000000e+00 : f32
    %97 = vector.broadcast %cst_39 : f32 to vector<16x64xf32>
    %98 = arith.maximumf %96, %97 : vector<16x64xf32>
    %c280 = arith.constant 280 : index
    %c0_40 = arith.constant 0 : index
    %99 = vector.load %arg4[%c280, %c0_40] : memref<456x128xf32, #tpu.memory_space<vmem>>, vector<64x32xf32>
    %cst_41 = arith.constant dense<0.000000e+00> : vector<16x32xf32>
    %100 = tpu.matmul %98, %99, %cst_41 {dimension_numbers = #tpu.dot_dimension_numbers<[1], [0], [0], [1], [0, 0, 1, 1], [], []>} : vector<16x64xf32>, vector<64x32xf32>, vector<16x32xf32> -> vector<16x32xf32>
    %101 = arith.addf %75, %100 : vector<16x32xf32>
    %c344 = arith.constant 344 : index
    %c0_42 = arith.constant 0 : index
    %102 = vector.load %arg4[%c344, %c0_42] : memref<456x128xf32, #tpu.memory_space<vmem>>, vector<1x32xf32>
    %103 = vector.broadcast %102 : vector<1x32xf32> to vector<16x32xf32>
    %104 = arith.addf %101, %103 : vector<16x32xf32>
    %cst_43 = arith.constant dense<0.000000e+00> : vector<16xf32>
    %105 = vector.multi_reduction <add>, %104, %cst_43 [1] : vector<16x32xf32> to vector<16xf32>
    %106 = vector.shape_cast %105 : vector<16xf32> to vector<16x1xf32>
    %cst_44 = arith.constant 3.200000e+01 : f32
    %107 = vector.broadcast %cst_44 : f32 to vector<16x1xf32>
    %108 = arith.divf %106, %107 : vector<16x1xf32>
    %109 = vector.broadcast %108 : vector<16x1xf32> to vector<16x32xf32>
    %110 = arith.subf %104, %109 : vector<16x32xf32>
    %111 = arith.mulf %110, %110 : vector<16x32xf32>
    %cst_45 = arith.constant dense<0.000000e+00> : vector<16xf32>
    %112 = vector.multi_reduction <add>, %111, %cst_45 [1] : vector<16x32xf32> to vector<16xf32>
    %113 = vector.shape_cast %112 : vector<16xf32> to vector<16x1xf32>
    %cst_46 = arith.constant 3.200000e+01 : f32
    %114 = vector.broadcast %cst_46 : f32 to vector<16x1xf32>
    %115 = arith.divf %113, %114 : vector<16x1xf32>
    %cst_47 = arith.constant 9.99999974E-6 : f32
    %116 = vector.broadcast %cst_47 : f32 to vector<16x1xf32>
    %117 = arith.addf %115, %116 : vector<16x1xf32>
    %118 = math.rsqrt %117 : vector<16x1xf32>
    %119 = vector.broadcast %118 : vector<16x1xf32> to vector<16x32xf32>
    %120 = arith.mulf %110, %119 : vector<16x32xf32>
    %c352 = arith.constant 352 : index
    %c0_48 = arith.constant 0 : index
    %121 = vector.load %arg4[%c352, %c0_48] : memref<456x128xf32, #tpu.memory_space<vmem>>, vector<32x2xf32>
    %cst_49 = arith.constant dense<0.000000e+00> : vector<16x2xf32>
    %122 = tpu.matmul %120, %121, %cst_49 {dimension_numbers = #tpu.dot_dimension_numbers<[1], [0], [0], [1], [0, 0, 1, 1], [], []>} : vector<16x32xf32>, vector<32x2xf32>, vector<16x2xf32> -> vector<16x2xf32>
    %c384 = arith.constant 384 : index
    %c0_50 = arith.constant 0 : index
    %123 = vector.load %arg4[%c384, %c0_50] : memref<456x128xf32, #tpu.memory_space<vmem>>, vector<1x2xf32>
    %124 = vector.broadcast %123 : vector<1x2xf32> to vector<16x2xf32>
    %125 = arith.addf %122, %124 : vector<16x2xf32>
    %c392 = arith.constant 392 : index
    %c0_51 = arith.constant 0 : index
    %126 = vector.load %arg4[%c392, %c0_51] : memref<456x128xf32, #tpu.memory_space<vmem>>, vector<2x80xf32>
    %cst_52 = arith.constant dense<0.000000e+00> : vector<16x80xf32>
    %127 = tpu.matmul %125, %126, %cst_52 {dimension_numbers = #tpu.dot_dimension_numbers<[1], [0], [0], [1], [0, 0, 1, 1], [], []>} : vector<16x2xf32>, vector<2x80xf32>, vector<16x80xf32> -> vector<16x80xf32>
    %128 = tpu.iota {dimensions = array<i32: 0>} : vector<16x16xi32>
    %129 = vector.extract_strided_slice %127 {offsets = [0, 32], sizes = [16, 16], strides = [1, 1]} : vector<16x80xf32> to vector<16x16xf32>
    %c400 = arith.constant 400 : index
    %c0_53 = arith.constant 0 : index
    %130 = vector.load %arg4[%c400, %c0_53] : memref<456x128xf32, #tpu.memory_space<vmem>>, vector<1x16xf32>
    %131 = vector.broadcast %130 : vector<1x16xf32> to vector<16x16xf32>
    %132 = arith.addf %129, %131 : vector<16x16xf32>
    %133 = vector.extract_strided_slice %127 {offsets = [0, 0], sizes = [16, 16], strides = [1, 1]} : vector<16x80xf32> to vector<16x16xf32>
    %c2_i32 = arith.constant 2 : i32
    %134 = tpu.dynamic_rotate %133 by %c2_i32 dim 0 : vector<16x16xf32>, i32 -> vector<16x16xf32>
    %c2_i32_54 = arith.constant 2 : i32
    %135 = vector.broadcast %c2_i32_54 : i32 to vector<16x16xi32>
    %136 = arith.cmpi sge, %128, %135 : vector<16x16xi32>
    %c18_i32 = arith.constant 18 : i32
    %137 = vector.broadcast %c18_i32 : i32 to vector<16x16xi32>
    %138 = arith.cmpi slt, %128, %137 : vector<16x16xi32>
    %139 = arith.andi %136, %138 : vector<16x16xi1>
    %cst_55 = arith.constant 0.000000e+00 : f32
    %140 = vector.broadcast %cst_55 : f32 to vector<16x16xf32>
    %141 = arith.select %139, %134, %140 : vector<16x16xi1>, vector<16x16xf32>
    %142 = arith.addf %132, %141 : vector<16x16xf32>
    %143 = vector.extract_strided_slice %127 {offsets = [0, 16], sizes = [16, 16], strides = [1, 1]} : vector<16x80xf32> to vector<16x16xf32>
    %c1_i32 = arith.constant 1 : i32
    %144 = tpu.dynamic_rotate %143 by %c1_i32 dim 0 : vector<16x16xf32>, i32 -> vector<16x16xf32>
    %c1_i32_56 = arith.constant 1 : i32
    %145 = vector.broadcast %c1_i32_56 : i32 to vector<16x16xi32>
    %146 = arith.cmpi sge, %128, %145 : vector<16x16xi32>
    %c17_i32 = arith.constant 17 : i32
    %147 = vector.broadcast %c17_i32 : i32 to vector<16x16xi32>
    %148 = arith.cmpi slt, %128, %147 : vector<16x16xi32>
    %149 = arith.andi %146, %148 : vector<16x16xi1>
    %cst_57 = arith.constant 0.000000e+00 : f32
    %150 = vector.broadcast %cst_57 : f32 to vector<16x16xf32>
    %151 = arith.select %149, %144, %150 : vector<16x16xi1>, vector<16x16xf32>
    %152 = arith.addf %142, %151 : vector<16x16xf32>
    %153 = vector.extract_strided_slice %127 {offsets = [0, 48], sizes = [16, 16], strides = [1, 1]} : vector<16x80xf32> to vector<16x16xf32>
    %c15_i32 = arith.constant 15 : i32
    %154 = tpu.dynamic_rotate %153 by %c15_i32 dim 0 : vector<16x16xf32>, i32 -> vector<16x16xf32>
    %c-1_i32 = arith.constant -1 : i32
    %155 = vector.broadcast %c-1_i32 : i32 to vector<16x16xi32>
    %156 = arith.cmpi sge, %128, %155 : vector<16x16xi32>
    %c15_i32_58 = arith.constant 15 : i32
    %157 = vector.broadcast %c15_i32_58 : i32 to vector<16x16xi32>
    %158 = arith.cmpi slt, %128, %157 : vector<16x16xi32>
    %159 = arith.andi %156, %158 : vector<16x16xi1>
    %cst_59 = arith.constant 0.000000e+00 : f32
    %160 = vector.broadcast %cst_59 : f32 to vector<16x16xf32>
    %161 = arith.select %159, %154, %160 : vector<16x16xi1>, vector<16x16xf32>
    %162 = arith.addf %152, %161 : vector<16x16xf32>
    %163 = vector.extract_strided_slice %127 {offsets = [0, 64], sizes = [16, 16], strides = [1, 1]} : vector<16x80xf32> to vector<16x16xf32>
    %c14_i32 = arith.constant 14 : i32
    %164 = tpu.dynamic_rotate %163 by %c14_i32 dim 0 : vector<16x16xf32>, i32 -> vector<16x16xf32>
    %c-2_i32 = arith.constant -2 : i32
    %165 = vector.broadcast %c-2_i32 : i32 to vector<16x16xi32>
    %166 = arith.cmpi sge, %128, %165 : vector<16x16xi32>
    %c14_i32_60 = arith.constant 14 : i32
    %167 = vector.broadcast %c14_i32_60 : i32 to vector<16x16xi32>
    %168 = arith.cmpi slt, %128, %167 : vector<16x16xi32>
    %169 = arith.andi %166, %168 : vector<16x16xi1>
    %cst_61 = arith.constant 0.000000e+00 : f32
    %170 = vector.broadcast %cst_61 : f32 to vector<16x16xf32>
    %171 = arith.select %169, %164, %170 : vector<16x16xi1>, vector<16x16xf32>
    %172 = arith.addf %162, %171 : vector<16x16xf32>
    %173 = math.tanh %172 : vector<16x16xf32>
    %c408 = arith.constant 408 : index
    %c0_62 = arith.constant 0 : index
    %174 = vector.load %arg4[%c408, %c0_62] : memref<456x128xf32, #tpu.memory_space<vmem>>, vector<16x80xf32>
    %cst_63 = arith.constant dense<0.000000e+00> : vector<16x80xf32>
    %175 = tpu.matmul %173, %174, %cst_63 {dimension_numbers = #tpu.dot_dimension_numbers<[1], [0], [0], [1], [0, 0, 1, 1], [], []>} : vector<16x16xf32>, vector<16x80xf32>, vector<16x80xf32> -> vector<16x80xf32>
    %176 = tpu.iota {dimensions = array<i32: 0>} : vector<16x16xi32>
    %177 = vector.extract_strided_slice %175 {offsets = [0, 32], sizes = [16, 16], strides = [1, 1]} : vector<16x80xf32> to vector<16x16xf32>
    %c424 = arith.constant 424 : index
    %c0_64 = arith.constant 0 : index
    %178 = vector.load %arg4[%c424, %c0_64] : memref<456x128xf32, #tpu.memory_space<vmem>>, vector<1x16xf32>
    %179 = vector.broadcast %178 : vector<1x16xf32> to vector<16x16xf32>
    %180 = arith.addf %177, %179 : vector<16x16xf32>
    %181 = vector.extract_strided_slice %175 {offsets = [0, 0], sizes = [16, 16], strides = [1, 1]} : vector<16x80xf32> to vector<16x16xf32>
    %c2_i32_65 = arith.constant 2 : i32
    %182 = tpu.dynamic_rotate %181 by %c2_i32_65 dim 0 : vector<16x16xf32>, i32 -> vector<16x16xf32>
    %c2_i32_66 = arith.constant 2 : i32
    %183 = vector.broadcast %c2_i32_66 : i32 to vector<16x16xi32>
    %184 = arith.cmpi sge, %176, %183 : vector<16x16xi32>
    %c18_i32_67 = arith.constant 18 : i32
    %185 = vector.broadcast %c18_i32_67 : i32 to vector<16x16xi32>
    %186 = arith.cmpi slt, %176, %185 : vector<16x16xi32>
    %187 = arith.andi %184, %186 : vector<16x16xi1>
    %cst_68 = arith.constant 0.000000e+00 : f32
    %188 = vector.broadcast %cst_68 : f32 to vector<16x16xf32>
    %189 = arith.select %187, %182, %188 : vector<16x16xi1>, vector<16x16xf32>
    %190 = arith.addf %180, %189 : vector<16x16xf32>
    %191 = vector.extract_strided_slice %175 {offsets = [0, 16], sizes = [16, 16], strides = [1, 1]} : vector<16x80xf32> to vector<16x16xf32>
    %c1_i32_69 = arith.constant 1 : i32
    %192 = tpu.dynamic_rotate %191 by %c1_i32_69 dim 0 : vector<16x16xf32>, i32 -> vector<16x16xf32>
    %c1_i32_70 = arith.constant 1 : i32
    %193 = vector.broadcast %c1_i32_70 : i32 to vector<16x16xi32>
    %194 = arith.cmpi sge, %176, %193 : vector<16x16xi32>
    %c17_i32_71 = arith.constant 17 : i32
    %195 = vector.broadcast %c17_i32_71 : i32 to vector<16x16xi32>
    %196 = arith.cmpi slt, %176, %195 : vector<16x16xi32>
    %197 = arith.andi %194, %196 : vector<16x16xi1>
    %cst_72 = arith.constant 0.000000e+00 : f32
    %198 = vector.broadcast %cst_72 : f32 to vector<16x16xf32>
    %199 = arith.select %197, %192, %198 : vector<16x16xi1>, vector<16x16xf32>
    %200 = arith.addf %190, %199 : vector<16x16xf32>
    %201 = vector.extract_strided_slice %175 {offsets = [0, 48], sizes = [16, 16], strides = [1, 1]} : vector<16x80xf32> to vector<16x16xf32>
    %c15_i32_73 = arith.constant 15 : i32
    %202 = tpu.dynamic_rotate %201 by %c15_i32_73 dim 0 : vector<16x16xf32>, i32 -> vector<16x16xf32>
    %c-1_i32_74 = arith.constant -1 : i32
    %203 = vector.broadcast %c-1_i32_74 : i32 to vector<16x16xi32>
    %204 = arith.cmpi sge, %176, %203 : vector<16x16xi32>
    %c15_i32_75 = arith.constant 15 : i32
    %205 = vector.broadcast %c15_i32_75 : i32 to vector<16x16xi32>
    %206 = arith.cmpi slt, %176, %205 : vector<16x16xi32>
    %207 = arith.andi %204, %206 : vector<16x16xi1>
    %cst_76 = arith.constant 0.000000e+00 : f32
    %208 = vector.broadcast %cst_76 : f32 to vector<16x16xf32>
    %209 = arith.select %207, %202, %208 : vector<16x16xi1>, vector<16x16xf32>
    %210 = arith.addf %200, %209 : vector<16x16xf32>
    %211 = vector.extract_strided_slice %175 {offsets = [0, 64], sizes = [16, 16], strides = [1, 1]} : vector<16x80xf32> to vector<16x16xf32>
    %c14_i32_77 = arith.constant 14 : i32
    %212 = tpu.dynamic_rotate %211 by %c14_i32_77 dim 0 : vector<16x16xf32>, i32 -> vector<16x16xf32>
    %c-2_i32_78 = arith.constant -2 : i32
    %213 = vector.broadcast %c-2_i32_78 : i32 to vector<16x16xi32>
    %214 = arith.cmpi sge, %176, %213 : vector<16x16xi32>
    %c14_i32_79 = arith.constant 14 : i32
    %215 = vector.broadcast %c14_i32_79 : i32 to vector<16x16xi32>
    %216 = arith.cmpi slt, %176, %215 : vector<16x16xi32>
    %217 = arith.andi %214, %216 : vector<16x16xi1>
    %cst_80 = arith.constant 0.000000e+00 : f32
    %218 = vector.broadcast %cst_80 : f32 to vector<16x16xf32>
    %219 = arith.select %217, %212, %218 : vector<16x16xi1>, vector<16x16xf32>
    %220 = arith.addf %210, %219 : vector<16x16xf32>
    %221 = math.tanh %220 : vector<16x16xf32>
    %c432 = arith.constant 432 : index
    %c0_81 = arith.constant 0 : index
    %222 = vector.load %arg4[%c432, %c0_81] : memref<456x128xf32, #tpu.memory_space<vmem>>, vector<16x10xf32>
    %cst_82 = arith.constant dense<0.000000e+00> : vector<16x10xf32>
    %223 = tpu.matmul %221, %222, %cst_82 {dimension_numbers = #tpu.dot_dimension_numbers<[1], [0], [0], [1], [0, 0, 1, 1], [], []>} : vector<16x16xf32>, vector<16x10xf32>, vector<16x10xf32> -> vector<16x10xf32>
    %224 = tpu.iota {dimensions = array<i32: 0>} : vector<16x2xi32>
    %225 = vector.extract_strided_slice %223 {offsets = [0, 4], sizes = [16, 2], strides = [1, 1]} : vector<16x10xf32> to vector<16x2xf32>
    %c448 = arith.constant 448 : index
    %c0_83 = arith.constant 0 : index
    %226 = vector.load %arg4[%c448, %c0_83] : memref<456x128xf32, #tpu.memory_space<vmem>>, vector<1x2xf32>
    %227 = vector.broadcast %226 : vector<1x2xf32> to vector<16x2xf32>
    %228 = arith.addf %225, %227 : vector<16x2xf32>
    %229 = vector.extract_strided_slice %223 {offsets = [0, 0], sizes = [16, 2], strides = [1, 1]} : vector<16x10xf32> to vector<16x2xf32>
    %c2_i32_84 = arith.constant 2 : i32
    %230 = tpu.dynamic_rotate %229 by %c2_i32_84 dim 0 : vector<16x2xf32>, i32 -> vector<16x2xf32>
    %c2_i32_85 = arith.constant 2 : i32
    %231 = vector.broadcast %c2_i32_85 : i32 to vector<16x2xi32>
    %232 = arith.cmpi sge, %224, %231 : vector<16x2xi32>
    %c18_i32_86 = arith.constant 18 : i32
    %233 = vector.broadcast %c18_i32_86 : i32 to vector<16x2xi32>
    %234 = arith.cmpi slt, %224, %233 : vector<16x2xi32>
    %235 = arith.andi %232, %234 : vector<16x2xi1>
    %cst_87 = arith.constant 0.000000e+00 : f32
    %236 = vector.broadcast %cst_87 : f32 to vector<16x2xf32>
    %237 = arith.select %235, %230, %236 : vector<16x2xi1>, vector<16x2xf32>
    %238 = arith.addf %228, %237 : vector<16x2xf32>
    %239 = vector.extract_strided_slice %223 {offsets = [0, 2], sizes = [16, 2], strides = [1, 1]} : vector<16x10xf32> to vector<16x2xf32>
    %c1_i32_88 = arith.constant 1 : i32
    %240 = tpu.dynamic_rotate %239 by %c1_i32_88 dim 0 : vector<16x2xf32>, i32 -> vector<16x2xf32>
    %c1_i32_89 = arith.constant 1 : i32
    %241 = vector.broadcast %c1_i32_89 : i32 to vector<16x2xi32>
    %242 = arith.cmpi sge, %224, %241 : vector<16x2xi32>
    %c17_i32_90 = arith.constant 17 : i32
    %243 = vector.broadcast %c17_i32_90 : i32 to vector<16x2xi32>
    %244 = arith.cmpi slt, %224, %243 : vector<16x2xi32>
    %245 = arith.andi %242, %244 : vector<16x2xi1>
    %cst_91 = arith.constant 0.000000e+00 : f32
    %246 = vector.broadcast %cst_91 : f32 to vector<16x2xf32>
    %247 = arith.select %245, %240, %246 : vector<16x2xi1>, vector<16x2xf32>
    %248 = arith.addf %238, %247 : vector<16x2xf32>
    %249 = vector.extract_strided_slice %223 {offsets = [0, 6], sizes = [16, 2], strides = [1, 1]} : vector<16x10xf32> to vector<16x2xf32>
    %c15_i32_92 = arith.constant 15 : i32
    %250 = tpu.dynamic_rotate %249 by %c15_i32_92 dim 0 : vector<16x2xf32>, i32 -> vector<16x2xf32>
    %c-1_i32_93 = arith.constant -1 : i32
    %251 = vector.broadcast %c-1_i32_93 : i32 to vector<16x2xi32>
    %252 = arith.cmpi sge, %224, %251 : vector<16x2xi32>
    %c15_i32_94 = arith.constant 15 : i32
    %253 = vector.broadcast %c15_i32_94 : i32 to vector<16x2xi32>
    %254 = arith.cmpi slt, %224, %253 : vector<16x2xi32>
    %255 = arith.andi %252, %254 : vector<16x2xi1>
    %cst_95 = arith.constant 0.000000e+00 : f32
    %256 = vector.broadcast %cst_95 : f32 to vector<16x2xf32>
    %257 = arith.select %255, %250, %256 : vector<16x2xi1>, vector<16x2xf32>
    %258 = arith.addf %248, %257 : vector<16x2xf32>
    %259 = vector.extract_strided_slice %223 {offsets = [0, 8], sizes = [16, 2], strides = [1, 1]} : vector<16x10xf32> to vector<16x2xf32>
    %c14_i32_96 = arith.constant 14 : i32
    %260 = tpu.dynamic_rotate %259 by %c14_i32_96 dim 0 : vector<16x2xf32>, i32 -> vector<16x2xf32>
    %c-2_i32_97 = arith.constant -2 : i32
    %261 = vector.broadcast %c-2_i32_97 : i32 to vector<16x2xi32>
    %262 = arith.cmpi sge, %224, %261 : vector<16x2xi32>
    %c14_i32_98 = arith.constant 14 : i32
    %263 = vector.broadcast %c14_i32_98 : i32 to vector<16x2xi32>
    %264 = arith.cmpi slt, %224, %263 : vector<16x2xi32>
    %265 = arith.andi %262, %264 : vector<16x2xi1>
    %cst_99 = arith.constant 0.000000e+00 : f32
    %266 = vector.broadcast %cst_99 : f32 to vector<16x2xf32>
    %267 = arith.select %265, %260, %266 : vector<16x2xi1>, vector<16x2xf32>
    %268 = arith.addf %258, %267 : vector<16x2xf32>
    %269 = arith.addf %125, %268 : vector<16x2xf32>
    %c0_100 = arith.constant 0 : index
    %c0_101 = arith.constant 0 : index
    %270 = vector.load %arg5[%c0_100, %c0_101] : memref<16x2xf32, #tpu.memory_space<vmem>>, vector<16x2xf32>
    tpu.vector_store %arg5[%c0_100, %c0_101], %269 {strides = array<i32>} : memref<16x2xf32, #tpu.memory_space<vmem>>, vector<16x2xf32>,
    return
  }
  func.func @transform_0(%arg0: i32) -> (i32, i32) {
    %c0_i32 = arith.constant 0 : i32
    %c0_i32_0 = arith.constant 0 : i32
    %c0_i32_1 = arith.constant 0 : i32
    return %c0_i32, %c0_i32_0 : i32, i32
  }
  func.func @transform_1(%arg0: i32) -> (i32, i32) {
    %c0_i32 = arith.constant 0 : i32
    %c0_i32_0 = arith.constant 0 : i32
    %c0_i32_1 = arith.constant 0 : i32
    return %c0_i32, %c0_i32_0 : i32, i32
  }
  func.func @transform_2(%arg0: i32) -> i32 {
    %c0_i32 = arith.constant 0 : i32
    %c0_i32_0 = arith.constant 0 : i32
    return %c0_i32 : i32
  }
  func.func @transform_3(%arg0: i32) -> (i32, i32) {
    %c0_i32 = arith.constant 0 : i32
    %c0_i32_0 = arith.constant 0 : i32
    %c0_i32_1 = arith.constant 0 : i32
    return %c0_i32, %c0_i32_0 : i32, i32
  }
  func.func @transform_4(%arg0: i32) -> (i32, i32) {
    %c0_i32 = arith.constant 0 : i32
    %c0_i32_0 = arith.constant 0 : i32
    %c0_i32_1 = arith.constant 0 : i32
    return %c0_i32, %c0_i32_0 : i32, i32
  }
}

</mosaic_0001>

<llo_original>
// kernel: yukarin_sosf_forward.1
$region0: #{yukarin_sosf_forward.1}
  #allocation0 [shape = 'u32[]', space=smem, size = 0x4, offset = 0x4, fixed_abs, tag = 'smem constant byte address 0x4 - core index']
  #allocation1 [shape = 'u32[144,128]{1,0:T(1,128)}', space=vmem, size = 0x12000, scoped, tag = 'internal scratch']
  #allocation2 [shape = 's32[1]{0:T(128)S(6)}', space=smem, size = 0x200, scoped, tag = 'scoped memory for yukarin_sosf_forward.1']
  %s0 = inlined_call_operand.vmem [shape: f32[16,1], index: 0, kind: input, shape index: {}]
  %s1 = inlined_call_operand.vmem [shape: s32[16,1], index: 1, kind: input, shape index: {}]
  %s2 = inlined_call_operand.<no memory space> [shape: s32[1], index: 2, kind: input, shape index: {}]
  %s3 = inlined_call_operand.hbm [shape: f32[456,128], index: 3, kind: input, shape index: {}]
  %s4 = inlined_call_operand.vmem [shape: f32[16,2], index: 4, kind: output, shape index: {}]
  %s5 = sld [smem:[#allocation0]]
  $region30: #{yukarin_sosf_forward.1} parent=0
    _
  %s7 = ssub.s32 1, %s5
  %s8 = scalar_select 0, %s7, %s5
  %9 = sst [smem:[#allocation2]] %s2
  $region1: #{yukarin_sosf_forward.1} parent=0
    #allocation3 [shape = 'u8[233472]{0}', space=vmem, size = 0x39000, scoped, tag = 'input window, operand 3, single buffered']
    #allocation4 [shape = 's32[1]{0}', space=sflag, size = 0x4, scoped, tag = 'scoped memory for yukarin_sosf_forward.1']
    %10 = vsyncpa [#allocation4], 0
    // Predicated region
    $region2: #{yukarin_sosf_forward.1} parent=1 // pred_check
      _
    $region3: #{yukarin_sosf_forward.1} parent=1 // pred_check_branch
      %12 = sbr.rel (0) target = $region5
    $region4: #{yukarin_sosf_forward.1} parent=1 // pred_region
      _
    $region5: #{yukarin_sosf_forward.1} parent=1 // pred_fallthru
      _
    // Predicated region
    $region6: #{yukarin_sosf_forward.1} parent=1 // pred_check
      _
    $region7: #{yukarin_sosf_forward.1} parent=1 // pred_check_branch
      %14 = sbr.rel (0) target = $region9
    $region8: #{yukarin_sosf_forward.1} parent=1 // pred_region
      _
    $region9: #{yukarin_sosf_forward.1} parent=1 // pred_fallthru
      _
    // Predicated region
    $region10: #{yukarin_sosf_forward.1} parent=1 // pred_check
      _
    $region11: #{yukarin_sosf_forward.1} parent=1 // pred_check_branch
      %16 = sbr.rel (0) target = $region13
    $region12: #{yukarin_sosf_forward.1} parent=1 // pred_region
      _
    $region13: #{yukarin_sosf_forward.1} parent=1 // pred_fallthru
      _
    // Predicated region
    $region14: #{yukarin_sosf_forward.1} parent=1 // pred_check
      _
    $region15: #{yukarin_sosf_forward.1} parent=1 // pred_check_branch
      %18 = sbr.rel (0) target = $region17
    $region16: #{yukarin_sosf_forward.1} parent=1 // pred_region
      %s20 = ssub.s32 7296, 7296
      %21 = vsyncadd [#allocation4], %s20
      %s22 = sshll.u32 [#allocation3], 4
      %s23 = int_to_ptr.vmem [resolvable:$true] %s22
      %28 = dma.hbm_to_vmem [thread:$0]  %s3, 7296, %s23, [#allocation4], 128, 128, 8
    $region17: #{yukarin_sosf_forward.1} parent=1 // pred_fallthru
      _
    // Predicated region
    $region18: #{yukarin_sosf_forward.1} parent=1 // pred_check
      _
    $region19: #{yukarin_sosf_forward.1} parent=1 // pred_check_branch
      %30 = sbr.rel (0) target = $region21
    $region20: #{yukarin_sosf_forward.1} parent=1 // pred_region
      %31 = dma.done [#allocation4], 7296
    $region21: #{yukarin_sosf_forward.1} parent=1 // pred_fallthru
      _
    %v32 = vlaneseq
    %v33 = vand.u32 %v32, 127
    %v34 = vld [vmem:[%s1] sm:$0xff]
    %v35 = vld [vmem:[%s1 + $0x8] sm:$0xff]
    %36 = vset.pattern.permute.xlu0 0
    %37 = vperm.xlu0 %36, %v34
    %v38 = vpop.permute.xlu0 %37
    %39 = vset.pattern.permute.xlu0 0
    %40 = vperm.xlu0 %39, %v35
    %v41 = vpop.permute.xlu0 %40
    %vm42 = vcmp.eq.s32.totalorder %v33, %v38
    %vm43 = vcmp.eq.s32.totalorder %v33, %v41
    %v44 = vsel %vm42, 1, 0
    %v45 = vsel %vm43, 1, 0
    %v46 = vcvt.s32.f32 %v44
    %v47 = vcvt.s32.f32 %v45
    %s48 = sld [smem:[#allocation2]]
    %v49 = vstv %s48
    %vm50 = vcmp.eq.s32.totalorder %v33, %v49
    %v51 = vsel %vm50, 1, 0
    %v52 = vcvt.s32.f32 %v51
    %v53 = vld [vmem:[%s0] sm:$0xff]
    %v54 = vld [vmem:[%s0 + $0x8] sm:$0xff]
    %v55 = vld [vmem:[#allocation3 + $0x40] sm:$0x1]
    %57 = vset.pattern.permute.xlu0 0
    %58 = vperm.xlu0 %57, %v53
    %v59 = vpop.permute.xlu0 %58
    %62 = vset.pattern.permute.xlu0 0
    %63 = vperm.xlu0 %62, %v54
    %v64 = vpop.permute.xlu0 %63
    %v66 = vlaneseq
    %v67 = vshrl.u32 %v66, 7
    %v68 = vsub.s32 0, %v67
    %v69 = vrot.slane %v55, %v68
    %v70 = vmul.f32 %v59, %v69
    %v71 = vmul.f32 %v64, %v69
    %v72 = vld [vmem:[#allocation3] sm:$0xff]
    %v73 = vld [vmem:[#allocation3 + $0x8] sm:$0xff]
    %v74 = vld [vmem:[#allocation3 + $0x10] sm:$0xff]
    %v75 = vld [vmem:[#allocation3 + $0x18] sm:$0xff]
    %v76 = vld [vmem:[#allocation3 + $0x20] sm:$0xff]
    %v77 = vld [vmem:[#allocation3 + $0x28] sm:$0xff]
    %vm78 = vcmask 392192
    %v80 = vsel %vm78, %v46, 0
    %v83 = vsel %vm78, %v47, 0
    %85 = vmatprep.subr.mxu0 0.0
    %86 = vmatpush1.msra.mxu0 %v72
    %87 = vmatprep.subr.mxu0 0.0
    %88 = vmatpush1.msra.mxu0 %v73
    %89 = vmatprep.subr.mxu0 0.0
    %90 = vmatpush1.msra.mxu0 %v74
    %91 = vmatprep.subr.mxu0 0.0
    %92 = vmatpush1.msra.mxu0 %v75
    %93 = vmatprep.subr.mxu0 0.0
    %94 = vmatpush1.msra.mxu0 %v76
    %95 = vmatprep.subr.mxu0 0.0
    %96 = vmatpush1.msra.mxu0 %v77
    %97 = vmatprep.subr.mxu0 0.0
    %98 = vmatpush1.msra.mxu0 0.0
    %99 = vmatprep.subr.mxu0 0.0
    %100 = vmatpush1.msra.mxu0 0.0
    %101 = vmatprep.subr.mxu0 0.0
    %102 = vmatpush1.msra.mxu0 0.0
    %103 = vmatprep.subr.mxu0 0.0
    %104 = vmatpush1.msra.mxu0 0.0
    %105 = vmatprep.subr.mxu0 0.0
    %106 = vmatpush1.msra.mxu0 0.0
    %107 = vmatprep.subr.mxu0 0.0
    %108 = vmatpush1.msra.mxu0 0.0
    %109 = vmatprep.subr.mxu0 0.0
    %110 = vmatpush1.msra.mxu0 0.0
    %111 = vmatprep.subr.mxu0 0.0
    %112 = vmatpush1.msra.mxu0 0.0
    %113 = vmatprep.subr.mxu0 0.0
    %114 = vmatpush1.msra.mxu0 0.0
    %115 = vmatprep.subr.mxu0 0.0
    %116 = vmatpush1.msra.mxu0 0.0
    %117 = vmatprep.subr.mxu0 0.0
    %118 = vmatpush1.msra.mxu0 0.0
    %119 = vmatprep.subr.mxu0 0.0
    %120 = vmatpush1.msra.mxu0 0.0
    %121 = vmatprep.subr.mxu0 0.0
    %122 = vmatpush1.msra.mxu0 0.0
    %123 = vmatprep.subr.mxu0 0.0
    %124 = vmatpush1.msra.mxu0 0.0
    %125 = vmatprep.subr.mxu0 0.0
    %126 = vmatpush1.msra.mxu0 0.0
    %127 = vmatprep.subr.mxu0 0.0
    %128 = vmatpush1.msra.mxu0 0.0
    %129 = vmatprep.subr.mxu0 0.0
    %130 = vmatpush1.msra.mxu0 0.0
    %131 = vmatprep.subr.mxu0 0.0
    %132 = vmatpush1.msra.mxu0 0.0
    %133 = vmatprep.subr.mxu0 0.0
    %134 = vmatpush1.msra.mxu0 0.0
    %135 = vmatprep.subr.mxu0 0.0
    %136 = vmatpush1.msra.mxu0 0.0
    %137 = vmatprep.subr.mxu0 0.0
    %138 = vmatpush1.msra.mxu0 0.0
    %139 = vmatprep.subr.mxu0 0.0
    %140 = vmatpush1.msra.mxu0 0.0
    %141 = vmatprep.subr.mxu0 0.0
    %142 = vmatpush1.msra.mxu0 0.0
    %143 = vmatprep.subr.mxu0 0.0
    %144 = vmatpush1.msra.mxu0 0.0
    %145 = vmatprep.subr.mxu0 0.0
    %146 = vmatpush1.msra.mxu0 0.0
    %147 = vmatprep.subr.mxu0 0.0
    %148 = vmatpush1.msra.mxu0 0.0
    %149 = vmatprep.mubr.f32.mxu0 0.0
    %150 = vmatmul.mubr.f32.gmra.mrb[0].mxu0 %v80
    %v151 = vpop.f32.mrb[0].mxu0
    %v152 = vadd.f32 0.0, %v151
    %v153 = vpop.f32.mrb[0].mxu0
    %154 = vmatprep.mubr.f32.mxu0 0.0
    %155 = vmatmul.mubr.f32.gmra.mrb[0].mxu0 %v83
    %v156 = vpop.f32.mrb[0].mxu0
    %v157 = vadd.f32 0.0, %v156
    %v158 = vpop.f32.mrb[0].mxu0
    %159 = vdwg.mxu0
    %v160 = vadd.f32 %v70, %v152
    %v161 = vadd.f32 %v71, %v157
    %v162 = vld [vmem:[#allocation3 + $0x30] sm:$0xff]
    %v163 = vld [vmem:[#allocation3 + $0x38] sm:$0xff]
    %vm164 = vcmask 130048
    %v166 = vsel %vm164, %v52, 0
    %168 = vmatprep.subr.mxu0 0.0
    %169 = vmatpush1.msra.mxu0 %v162
    %170 = vmatprep.subr.mxu0 0.0
    %171 = vmatpush1.msra.mxu0 %v163
    %172 = vmatprep.subr.mxu0 0.0
    %173 = vmatpush1.msra.mxu0 0.0
    %174 = vmatprep.subr.mxu0 0.0
    %175 = vmatpush1.msra.mxu0 0.0
    %176 = vmatprep.subr.mxu0 0.0
    %177 = vmatpush1.msra.mxu0 0.0
    %178 = vmatprep.subr.mxu0 0.0
    %179 = vmatpush1.msra.mxu0 0.0
    %180 = vmatprep.subr.mxu0 0.0
    %181 = vmatpush1.msra.mxu0 0.0
    %182 = vmatprep.subr.mxu0 0.0
    %183 = vmatpush1.msra.mxu0 0.0
    %184 = vmatprep.subr.mxu0 0.0
    %185 = vmatpush1.msra.mxu0 0.0
    %186 = vmatprep.subr.mxu0 0.0
    %187 = vmatpush1.msra.mxu0 0.0
    %188 = vmatprep.subr.mxu0 0.0
    %189 = vmatpush1.msra.mxu0 0.0
    %190 = vmatprep.subr.mxu0 0.0
    %191 = vmatpush1.msra.mxu0 0.0
    %192 = vmatprep.subr.mxu0 0.0
    %193 = vmatpush1.msra.mxu0 0.0
    %194 = vmatprep.subr.mxu0 0.0
    %195 = vmatpush1.msra.mxu0 0.0
    %196 = vmatprep.subr.mxu0 0.0
    %197 = vmatpush1.msra.mxu0 0.0
    %198 = vmatprep.subr.mxu0 0.0
    %199 = vmatpush1.msra.mxu0 0.0
    %200 = vmatprep.subr.mxu0 0.0
    %201 = vmatpush1.msra.mxu0 0.0
    %202 = vmatprep.subr.mxu0 0.0
    %203 = vmatpush1.msra.mxu0 0.0
    %204 = vmatprep.subr.mxu0 0.0
    %205 = vmatpush1.msra.mxu0 0.0
    %206 = vmatprep.subr.mxu0 0.0
    %207 = vmatpush1.msra.mxu0 0.0
    %208 = vmatprep.subr.mxu0 0.0
    %209 = vmatpush1.msra.mxu0 0.0
    %210 = vmatprep.subr.mxu0 0.0
    %211 = vmatpush1.msra.mxu0 0.0
    %212 = vmatprep.subr.mxu0 0.0
    %213 = vmatpush1.msra.mxu0 0.0
    %214 = vmatprep.subr.mxu0 0.0
    %215 = vmatpush1.msra.mxu0 0.0
    %216 = vmatprep.subr.mxu0 0.0
    %217 = vmatpush1.msra.mxu0 0.0
    %218 = vmatprep.subr.mxu0 0.0
    %219 = vmatpush1.msra.mxu0 0.0
    %220 = vmatprep.subr.mxu0 0.0
    %221 = vmatpush1.msra.mxu0 0.0
    %222 = vmatprep.subr.mxu0 0.0
    %223 = vmatpush1.msra.mxu0 0.0
    %224 = vmatprep.subr.mxu0 0.0
    %225 = vmatpush1.msra.mxu0 0.0
    %226 = vmatprep.subr.mxu0 0.0
    %227 = vmatpush1.msra.mxu0 0.0
    %228 = vmatprep.subr.mxu0 0.0
    %229 = vmatpush1.msra.mxu0 0.0
    %230 = vmatprep.subr.mxu0 0.0
    %231 = vmatpush1.msra.mxu0 0.0
    %232 = vmatprep.mubr.f32.mxu0 0.0
    %233 = vmatmul.mubr.f32.gmra.mrb[0].mxu0 %v166
    %v234 = vpop.f32.mrb[0].mxu0
    %v235 = vadd.f32 0.0, %v234
    %v236 = vpop.f32.mrb[0].mxu0
    %237 = vdwg.mxu0
    %v238 = vlaneseq
    %v239 = vshrl.u32 %v238, 7
    %v240 = vsub.s32 0, %v239
    %v241 = vrot.slane %v235, %v240
    %v242 = vadd.f32 %v160, %v241
    %v243 = vadd.f32 %v161, %v241
    %v244 = vld [vmem:[#allocation3 + $0x48] sm:$0x1]
    %v245 = vlaneseq
    %v246 = vshrl.u32 %v245, 7
    %v247 = vsub.s32 0, %v246
    %v248 = vrot.slane %v244, %v247
    %v249 = vadd.f32 %v242, %v248
    %v250 = vadd.f32 %v243, %v248
    %vm251 = vcmask 261120
    %v252 = vsel %vm251, %v249, 0.0
    %253 = vadd.xlane.f32.xlu0 %v252
    %v254 = vpop.xlane.xlu0 %253
    %v255 = vsel %vm251, %v250, 0.0
    %256 = vadd.xlane.f32.xlu0 %v255
    %v257 = vpop.xlane.xlu0 %256
    %v258 = vrcp.pop 32.0
    %v259 = vmul.f32 %v254, %v258
    %v260 = vmul.f32 %v257, %v258
    %v261 = vsub.f32 %v249, %v259
    %v262 = vsub.f32 %v250, %v260
    %v263 = vmul.f32 %v261, %v261
    %v264 = vmul.f32 %v262, %v262
    %v265 = vsel %vm251, %v263, 0.0
    %266 = vadd.xlane.f32.xlu0 %v265
    %v267 = vpop.xlane.xlu0 %266
    %v268 = vsel %vm251, %v264, 0.0
    %269 = vadd.xlane.f32.xlu0 %v268
    %v270 = vpop.xlane.xlu0 %269
    %v271 = vmul.f32 %v267, %v258
    %v272 = vmul.f32 %v270, %v258
    %v273 = vadd.f32 %v271, 1e-05
    %v274 = vadd.f32 %v272, 1e-05
    %v275 = vrsqrt.pop %v273
    %v276 = vrsqrt.pop %v274
    %v277 = vmul.f32 %v261, %v275
    %v278 = vmul.f32 %v262, %v276
    %v279 = vld [vmem:[#allocation3 + $0x50] sm:$0xff]
    %v280 = vld [vmem:[#allocation3 + $0x58] sm:$0xff]
    %v281 = vld [vmem:[#allocation3 + $0x60] sm:$0xff]
    %v282 = vld [vmem:[#allocation3 + $0x68] sm:$0xff]
    %v283 = vld [vmem:[#allocation3 + $0x70] sm:$0x1]
    %v284 = vlaneseq
    %v285 = vshrl.u32 %v284, 7
    %v286 = vsub.s32 0, %v285
    %v287 = vrot.slane %v283, %v286
    %v289 = vsel %vm251, %v277, 0
    %v292 = vsel %vm251, %v278, 0
    %294 = vmatprep.subr.mxu0 0.0
    %295 = vmatpush1.msra.mxu0 %v279
    %296 = vmatprep.subr.mxu0 0.0
    %297 = vmatpush1.msra.mxu0 %v280
    %298 = vmatprep.subr.mxu0 0.0
    %299 = vmatpush1.msra.mxu0 %v281
    %300 = vmatprep.subr.mxu0 0.0
    %301 = vmatpush1.msra.mxu0 %v282
    %302 = vmatprep.subr.mxu0 0.0
    %303 = vmatpush1.msra.mxu0 0.0
    %304 = vmatprep.subr.mxu0 0.0
    %305 = vmatpush1.msra.mxu0 0.0
    %306 = vmatprep.subr.mxu0 0.0
    %307 = vmatpush1.msra.mxu0 0.0
    %308 = vmatprep.subr.mxu0 0.0
    %309 = vmatpush1.msra.mxu0 0.0
    %310 = vmatprep.subr.mxu0 0.0
    %311 = vmatpush1.msra.mxu0 0.0
    %312 = vmatprep.subr.mxu0 0.0
    %313 = vmatpush1.msra.mxu0 0.0
    %314 = vmatprep.subr.mxu0 0.0
    %315 = vmatpush1.msra.mxu0 0.0
    %316 = vmatprep.subr.mxu0 0.0
    %317 = vmatpush1.msra.mxu0 0.0
    %318 = vmatprep.subr.mxu0 0.0
    %319 = vmatpush1.msra.mxu0 0.0
    %320 = vmatprep.subr.mxu0 0.0
    %321 = vmatpush1.msra.mxu0 0.0
    %322 = vmatprep.subr.mxu0 0.0
    %323 = vmatpush1.msra.mxu0 0.0
    %324 = vmatprep.subr.mxu0 0.0
    %325 = vmatpush1.msra.mxu0 0.0
    %326 = vmatprep.subr.mxu0 0.0
    %327 = vmatpush1.msra.mxu0 0.0
    %328 = vmatprep.subr.mxu0 0.0
    %329 = vmatpush1.msra.mxu0 0.0
    %330 = vmatprep.subr.mxu0 0.0
    %331 = vmatpush1.msra.mxu0 0.0
    %332 = vmatprep.subr.mxu0 0.0
    %333 = vmatpush1.msra.mxu0 0.0
    %334 = vmatprep.subr.mxu0 0.0
    %335 = vmatpush1.msra.mxu0 0.0
    %336 = vmatprep.subr.mxu0 0.0
    %337 = vmatpush1.msra.mxu0 0.0
    %338 = vmatprep.subr.mxu0 0.0
    %339 = vmatpush1.msra.mxu0 0.0
    %340 = vmatprep.subr.mxu0 0.0
    %341 = vmatpush1.msra.mxu0 0.0
    %342 = vmatprep.subr.mxu0 0.0
    %343 = vmatpush1.msra.mxu0 0.0
    %344 = vmatprep.subr.mxu0 0.0
    %345 = vmatpush1.msra.mxu0 0.0
    %346 = vmatprep.subr.mxu0 0.0
    %347 = vmatpush1.msra.mxu0 0.0
    %348 = vmatprep.subr.mxu0 0.0
    %349 = vmatpush1.msra.mxu0 0.0
    %350 = vmatprep.subr.mxu0 0.0
    %351 = vmatpush1.msra.mxu0 0.0
    %352 = vmatprep.subr.mxu0 0.0
    %353 = vmatpush1.msra.mxu0 0.0
    %354 = vmatprep.subr.mxu0 0.0
    %355 = vmatpush1.msra.mxu0 0.0
    %356 = vmatprep.subr.mxu0 0.0
    %357 = vmatpush1.msra.mxu0 0.0
    %358 = vmatprep.mubr.f32.mxu0 0.0
    %359 = vmatmul.mubr.f32.gmra.mrb[0].mxu0 %v289
    %v360 = vpop.f32.mrb[0].mxu0
    %v361 = vadd.f32 %v287, %v360
    %v362 = vpop.f32.mrb[0].mxu0
    %363 = vmatprep.mubr.f32.mxu0 0.0
    %364 = vmatmul.mubr.f32.gmra.mrb[0].mxu0 %v292
    %v365 = vpop.f32.mrb[0].mxu0
    %v366 = vadd.f32 %v287, %v365
    %v367 = vpop.f32.mrb[0].mxu0
    %368 = vdwg.mxu0
    %v369 = vld [vmem:[#allocation3 + $0x78] sm:$0xff]
    %v370 = vld [vmem:[#allocation3 + $0x80] sm:$0xff]
    %v371 = vld [vmem:[#allocation3 + $0x88] sm:$0xff]
    %v372 = vld [vmem:[#allocation3 + $0x90] sm:$0xff]
    %v373 = vld [vmem:[#allocation3 + $0x98] sm:$0x1]
    %v374 = vlaneseq
    %v375 = vshrl.u32 %v374, 7
    %v376 = vsub.s32 0, %v375
    %v377 = vrot.slane %v373, %v376
    %378 = vmatprep.subr.mxu0 0.0
    %379 = vmatpush1.msra.mxu0 %v369
    %380 = vmatprep.subr.mxu0 0.0
    %381 = vmatpush1.msra.mxu0 %v370
    %382 = vmatprep.subr.mxu0 0.0
    %383 = vmatpush1.msra.mxu0 %v371
    %384 = vmatprep.subr.mxu0 0.0
    %385 = vmatpush1.msra.mxu0 %v372
    %386 = vmatprep.subr.mxu0 0.0
    %387 = vmatpush1.msra.mxu0 0.0
    %388 = vmatprep.subr.mxu0 0.0
    %389 = vmatpush1.msra.mxu0 0.0
    %390 = vmatprep.subr.mxu0 0.0
    %391 = vmatpush1.msra.mxu0 0.0
    %392 = vmatprep.subr.mxu0 0.0
    %393 = vmatpush1.msra.mxu0 0.0
    %394 = vmatprep.subr.mxu0 0.0
    %395 = vmatpush1.msra.mxu0 0.0
    %396 = vmatprep.subr.mxu0 0.0
    %397 = vmatpush1.msra.mxu0 0.0
    %398 = vmatprep.subr.mxu0 0.0
    %399 = vmatpush1.msra.mxu0 0.0
    %400 = vmatprep.subr.mxu0 0.0
    %401 = vmatpush1.msra.mxu0 0.0
    %402 = vmatprep.subr.mxu0 0.0
    %403 = vmatpush1.msra.mxu0 0.0
    %404 = vmatprep.subr.mxu0 0.0
    %405 = vmatpush1.msra.mxu0 0.0
    %406 = vmatprep.subr.mxu0 0.0
    %407 = vmatpush1.msra.mxu0 0.0
    %408 = vmatprep.subr.mxu0 0.0
    %409 = vmatpush1.msra.mxu0 0.0
    %410 = vmatprep.subr.mxu0 0.0
    %411 = vmatpush1.msra.mxu0 0.0
    %412 = vmatprep.subr.mxu0 0.0
    %413 = vmatpush1.msra.mxu0 0.0
    %414 = vmatprep.subr.mxu0 0.0
    %415 = vmatpush1.msra.mxu0 0.0
    %416 = vmatprep.subr.mxu0 0.0
    %417 = vmatpush1.msra.mxu0 0.0
    %418 = vmatprep.subr.mxu0 0.0
    %419 = vmatpush1.msra.mxu0 0.0
    %420 = vmatprep.subr.mxu0 0.0
    %421 = vmatpush1.msra.mxu0 0.0
    %422 = vmatprep.subr.mxu0 0.0
    %423 = vmatpush1.msra.mxu0 0.0
    %424 = vmatprep.subr.mxu0 0.0
    %425 = vmatpush1.msra.mxu0 0.0
    %426 = vmatprep.subr.mxu0 0.0
    %427 = vmatpush1.msra.mxu0 0.0
    %428 = vmatprep.subr.mxu0 0.0
    %429 = vmatpush1.msra.mxu0 0.0
    %430 = vmatprep.subr.mxu0 0.0
    %431 = vmatpush1.msra.mxu0 0.0
    %432 = vmatprep.subr.mxu0 0.0
    %433 = vmatpush1.msra.mxu0 0.0
    %434 = vmatprep.subr.mxu0 0.0
    %435 = vmatpush1.msra.mxu0 0.0
    %436 = vmatprep.subr.mxu0 0.0
    %437 = vmatpush1.msra.mxu0 0.0
    %438 = vmatprep.subr.mxu0 0.0
    %439 = vmatpush1.msra.mxu0 0.0
    %440 = vmatprep.subr.mxu0 0.0
    %441 = vmatpush1.msra.mxu0 0.0
    %442 = vmatprep.mubr.f32.mxu0 0.0
    %443 = vmatmul.mubr.f32.gmra.mrb[0].mxu0 %v289
    %v444 = vpop.f32.mrb[0].mxu0
    %v445 = vadd.f32 %v377, %v444
    %v446 = vpop.f32.mrb[0].mxu0
    %447 = vmatprep.mubr.f32.mxu0 0.0
    %448 = vmatmul.mubr.f32.gmra.mrb[0].mxu0 %v292
    %v449 = vpop.f32.mrb[0].mxu0
    %v450 = vadd.f32 %v377, %v449
    %v451 = vpop.f32.mrb[0].mxu0
    %452 = vdwg.mxu0
    %v453 = vld [vmem:[#allocation3 + $0xa0] sm:$0xff]
    %v454 = vld [vmem:[#allocation3 + $0xa8] sm:$0xff]
    %v455 = vld [vmem:[#allocation3 + $0xb0] sm:$0xff]
    %v456 = vld [vmem:[#allocation3 + $0xb8] sm:$0xff]
    %v457 = vld [vmem:[#allocation3 + $0xc0] sm:$0x1]
    %v458 = vlaneseq
    %v459 = vshrl.u32 %v458, 7
    %v460 = vsub.s32 0, %v459
    %v461 = vrot.slane %v457, %v460
    %462 = vmatprep.subr.mxu0 0.0
    %463 = vmatpush1.msra.mxu0 %v453
    %464 = vmatprep.subr.mxu0 0.0
    %465 = vmatpush1.msra.mxu0 %v454
    %466 = vmatprep.subr.mxu0 0.0
    %467 = vmatpush1.msra.mxu0 %v455
    %468 = vmatprep.subr.mxu0 0.0
    %469 = vmatpush1.msra.mxu0 %v456
    %470 = vmatprep.subr.mxu0 0.0
    %471 = vmatpush1.msra.mxu0 0.0
    %472 = vmatprep.subr.mxu0 0.0
    %473 = vmatpush1.msra.mxu0 0.0
    %474 = vmatprep.subr.mxu0 0.0
    %475 = vmatpush1.msra.mxu0 0.0
    %476 = vmatprep.subr.mxu0 0.0
    %477 = vmatpush1.msra.mxu0 0.0
    %478 = vmatprep.subr.mxu0 0.0
    %479 = vmatpush1.msra.mxu0 0.0
    %480 = vmatprep.subr.mxu0 0.0
    %481 = vmatpush1.msra.mxu0 0.0
    %482 = vmatprep.subr.mxu0 0.0
    %483 = vmatpush1.msra.mxu0 0.0
    %484 = vmatprep.subr.mxu0 0.0
    %485 = vmatpush1.msra.mxu0 0.0
    %486 = vmatprep.subr.mxu0 0.0
    %487 = vmatpush1.msra.mxu0 0.0
    %488 = vmatprep.subr.mxu0 0.0
    %489 = vmatpush1.msra.mxu0 0.0
    %490 = vmatprep.subr.mxu0 0.0
    %491 = vmatpush1.msra.mxu0 0.0
    %492 = vmatprep.subr.mxu0 0.0
    %493 = vmatpush1.msra.mxu0 0.0
    %494 = vmatprep.subr.mxu0 0.0
    %495 = vmatpush1.msra.mxu0 0.0
    %496 = vmatprep.subr.mxu0 0.0
    %497 = vmatpush1.msra.mxu0 0.0
    %498 = vmatprep.subr.mxu0 0.0
    %499 = vmatpush1.msra.mxu0 0.0
    %500 = vmatprep.subr.mxu0 0.0
    %501 = vmatpush1.msra.mxu0 0.0
    %502 = vmatprep.subr.mxu0 0.0
    %503 = vmatpush1.msra.mxu0 0.0
    %504 = vmatprep.subr.mxu0 0.0
    %505 = vmatpush1.msra.mxu0 0.0
    %506 = vmatprep.subr.mxu0 0.0
    %507 = vmatpush1.msra.mxu0 0.0
    %508 = vmatprep.subr.mxu0 0.0
    %509 = vmatpush1.msra.mxu0 0.0
    %510 = vmatprep.subr.mxu0 0.0
    %511 = vmatpush1.msra.mxu0 0.0
    %512 = vmatprep.subr.mxu0 0.0
    %513 = vmatpush1.msra.mxu0 0.0
    %514 = vmatprep.subr.mxu0 0.0
    %515 = vmatpush1.msra.mxu0 0.0
    %516 = vmatprep.subr.mxu0 0.0
    %517 = vmatpush1.msra.mxu0 0.0
    %518 = vmatprep.subr.mxu0 0.0
    %519 = vmatpush1.msra.mxu0 0.0
    %520 = vmatprep.subr.mxu0 0.0
    %521 = vmatpush1.msra.mxu0 0.0
    %522 = vmatprep.subr.mxu0 0.0
    %523 = vmatpush1.msra.mxu0 0.0
    %524 = vmatprep.subr.mxu0 0.0
    %525 = vmatpush1.msra.mxu0 0.0
    %526 = vmatprep.mubr.f32.mxu0 0.0
    %527 = vmatmul.mubr.f32.gmra.mrb[0].mxu0 %v289
    %v528 = vpop.f32.mrb[0].mxu0
    %v529 = vadd.f32 %v461, %v528
    %v530 = vpop.f32.mrb[0].mxu0
    %531 = vmatprep.mubr.f32.mxu0 0.0
    %532 = vmatmul.mubr.f32.gmra.mrb[0].mxu0 %v292
    %v533 = vpop.f32.mrb[0].mxu0
    %v534 = vadd.f32 %v461, %v533
    %v535 = vpop.f32.mrb[0].mxu0
    %536 = vdwg.mxu0
    %v538 = vsel %vm251, %v361, 0
    %v541 = vsel %vm251, %v366, 0
    %v544 = vsel %vm251, %v445, 0
    %v547 = vsel %vm251, %v450, 0
    %549 = vmatprep.subr.mxu0 0.0
    %550 = vmatpush1.xpose.msra.mxu0 %v544
    %551 = vmatprep.subr.mxu0 0.0
    %552 = vmatpush1.xpose.msra.mxu0 %v547
    %553 = vmatprep.subr.mxu0 0.0
    %554 = vmatpush1.xpose.msra.mxu0 0.0
    %555 = vmatprep.subr.mxu0 0.0
    %556 = vmatpush1.xpose.msra.mxu0 0.0
    %557 = vmatprep.subr.mxu0 0.0
    %558 = vmatpush1.xpose.msra.mxu0 0.0
    %559 = vmatprep.subr.mxu0 0.0
    %560 = vmatpush1.xpose.msra.mxu0 0.0
    %561 = vmatprep.subr.mxu0 0.0
    %562 = vmatpush1.xpose.msra.mxu0 0.0
    %563 = vmatprep.subr.mxu0 0.0
    %564 = vmatpush1.xpose.msra.mxu0 0.0
    %565 = vmatprep.subr.mxu0 0.0
    %566 = vmatpush1.xpose.msra.mxu0 0.0
    %567 = vmatprep.subr.mxu0 0.0
    %568 = vmatpush1.xpose.msra.mxu0 0.0
    %569 = vmatprep.subr.mxu0 0.0
    %570 = vmatpush1.xpose.msra.mxu0 0.0
    %571 = vmatprep.subr.mxu0 0.0
    %572 = vmatpush1.xpose.msra.mxu0 0.0
    %573 = vmatprep.subr.mxu0 0.0
    %574 = vmatpush1.xpose.msra.mxu0 0.0
    %575 = vmatprep.subr.mxu0 0.0
    %576 = vmatpush1.xpose.msra.mxu0 0.0
    %577 = vmatprep.subr.mxu0 0.0
    %578 = vmatpush1.xpose.msra.mxu0 0.0
    %579 = vmatprep.subr.mxu0 0.0
    %580 = vmatpush1.xpose.msra.mxu0 0.0
    %581 = vmatprep.subr.mxu0 0.0
    %582 = vmatpush1.xpose.msra.mxu0 0.0
    %583 = vmatprep.subr.mxu0 0.0
    %584 = vmatpush1.xpose.msra.mxu0 0.0
    %585 = vmatprep.subr.mxu0 0.0
    %586 = vmatpush1.xpose.msra.mxu0 0.0
    %587 = vmatprep.subr.mxu0 0.0
    %588 = vmatpush1.xpose.msra.mxu0 0.0
    %589 = vmatprep.subr.mxu0 0.0
    %590 = vmatpush1.xpose.msra.mxu0 0.0
    %591 = vmatprep.subr.mxu0 0.0
    %592 = vmatpush1.xpose.msra.mxu0 0.0
    %593 = vmatprep.subr.mxu0 0.0
    %594 = vmatpush1.xpose.msra.mxu0 0.0
    %595 = vmatprep.subr.mxu0 0.0
    %596 = vmatpush1.xpose.msra.mxu0 0.0
    %597 = vmatprep.subr.mxu0 0.0
    %598 = vmatpush1.xpose.msra.mxu0 0.0
    %599 = vmatprep.subr.mxu0 0.0
    %600 = vmatpush1.xpose.msra.mxu0 0.0
    %601 = vmatprep.subr.mxu0 0.0
    %602 = vmatpush1.xpose.msra.mxu0 0.0
    %603 = vmatprep.subr.mxu0 0.0
    %604 = vmatpush1.xpose.msra.mxu0 0.0
    %605 = vmatprep.subr.mxu0 0.0
    %606 = vmatpush1.xpose.msra.mxu0 0.0
    %607 = vmatprep.subr.mxu0 0.0
    %608 = vmatpush1.xpose.msra.mxu0 0.0
    %609 = vmatprep.subr.mxu0 0.0
    %610 = vmatpush1.xpose.msra.mxu0 0.0
    %611 = vmatprep.subr.mxu0 0.0
    %612 = vmatpush1.xpose.msra.mxu0 0.0
    %613 = vmatprep.mubr.f32.mxu0 0.0
    %614 = vmatmul.mubr.f32.gmra.mrb[0].mxu0 %v538
    %v615 = vpop.f32.mrb[0].mxu0
    %v616 = vadd.f32 0.0, %v615
    %v617 = vpop.f32.mrb[0].mxu0
    %618 = vmatprep.mubr.f32.mxu0 0.0
    %619 = vmatmul.mubr.f32.gmra.mrb[0].mxu0 %v541
    %v620 = vpop.f32.mrb[0].mxu0
    %v621 = vadd.f32 0.0, %v620
    %v622 = vpop.f32.mrb[0].mxu0
    %623 = vdwg.mxu0
    %v624 = vsel %vm164, %v616, -inf
    %625 = vmax.xlane.f32.xlu0 %v624
    %v626 = vpop.xlane.xlu0 %625
    %v627 = vsel %vm164, %v621, -inf
    %628 = vmax.xlane.f32.xlu0 %v627
    %v629 = vpop.xlane.xlu0 %628
    %v630 = vsub.f32 %v616, %v626
    %v631 = vsub.f32 %v621, %v629
    %v632 = vmul.f32 %v630, 1.442695
    %v633 = vpow.pop %v632
    %v634 = vmul.f32 %v631, 1.442695
    %v635 = vpow.pop %v634
    %v636 = vsel %vm164, %v633, 0.0
    %637 = vadd.xlane.f32.xlu0 %v636
    %v638 = vpop.xlane.xlu0 %637
    %v639 = vsel %vm164, %v635, 0.0
    %640 = vadd.xlane.f32.xlu0 %v639
    %v641 = vpop.xlane.xlu0 %640
    %v642 = vrcp.pop %v638
    %v643 = vrcp.pop %v641
    %v644 = vmul.f32 %v633, %v642
    %v645 = vmul.f32 %v635, %v643
    %v647 = vsel %vm164, %v644, 0
    %v650 = vsel %vm164, %v645, 0
    %652 = vmatprep.subr.mxu0 0.0
    %653 = vmatpush1.msra.mxu0 %v529
    %654 = vmatprep.subr.mxu0 0.0
    %655 = vmatpush1.msra.mxu0 %v534
    %656 = vmatprep.subr.mxu0 0.0
    %657 = vmatpush1.msra.mxu0 0.0
    %658 = vmatprep.subr.mxu0 0.0
    %659 = vmatpush1.msra.mxu0 0.0
    %660 = vmatprep.subr.mxu0 0.0
    %661 = vmatpush1.msra.mxu0 0.0
    %662 = vmatprep.subr.mxu0 0.0
    %663 = vmatpush1.msra.mxu0 0.0
    %664 = vmatprep.subr.mxu0 0.0
    %665 = vmatpush1.msra.mxu0 0.0
    %666 = vmatprep.subr.mxu0 0.0
    %667 = vmatpush1.msra.mxu0 0.0
    %668 = vmatprep.subr.mxu0 0.0
    %669 = vmatpush1.msra.mxu0 0.0
    %670 = vmatprep.subr.mxu0 0.0
    %671 = vmatpush1.msra.mxu0 0.0
    %672 = vmatprep.subr.mxu0 0.0
    %673 = vmatpush1.msra.mxu0 0.0
    %674 = vmatprep.subr.mxu0 0.0
    %675 = vmatpush1.msra.mxu0 0.0
    %676 = vmatprep.subr.mxu0 0.0
    %677 = vmatpush1.msra.mxu0 0.0
    %678 = vmatprep.subr.mxu0 0.0
    %679 = vmatpush1.msra.mxu0 0.0
    %680 = vmatprep.subr.mxu0 0.0
    %681 = vmatpush1.msra.mxu0 0.0
    %682 = vmatprep.subr.mxu0 0.0
    %683 = vmatpush1.msra.mxu0 0.0
    %684 = vmatprep.subr.mxu0 0.0
    %685 = vmatpush1.msra.mxu0 0.0
    %686 = vmatprep.subr.mxu0 0.0
    %687 = vmatpush1.msra.mxu0 0.0
    %688 = vmatprep.subr.mxu0 0.0
    %689 = vmatpush1.msra.mxu0 0.0
    %690 = vmatprep.subr.mxu0 0.0
    %691 = vmatpush1.msra.mxu0 0.0
    %692 = vmatprep.subr.mxu0 0.0
    %693 = vmatpush1.msra.mxu0 0.0
    %694 = vmatprep.subr.mxu0 0.0
    %695 = vmatpush1.msra.mxu0 0.0
    %696 = vmatprep.subr.mxu0 0.0
    %697 = vmatpush1.msra.mxu0 0.0
    %698 = vmatprep.subr.mxu0 0.0
    %699 = vmatpush1.msra.mxu0 0.0
    %700 = vmatprep.subr.mxu0 0.0
    %701 = vmatpush1.msra.mxu0 0.0
    %702 = vmatprep.subr.mxu0 0.0
    %703 = vmatpush1.msra.mxu0 0.0
    %704 = vmatprep.subr.mxu0 0.0
    %705 = vmatpush1.msra.mxu0 0.0
    %706 = vmatprep.subr.mxu0 0.0
    %707 = vmatpush1.msra.mxu0 0.0
    %708 = vmatprep.subr.mxu0 0.0
    %709 = vmatpush1.msra.mxu0 0.0
    %710 = vmatprep.subr.mxu0 0.0
    %711 = vmatpush1.msra.mxu0 0.0
    %712 = vmatprep.subr.mxu0 0.0
    %713 = vmatpush1.msra.mxu0 0.0
    %714 = vmatprep.subr.mxu0 0.0
    %715 = vmatpush1.msra.mxu0 0.0
    %716 = vmatprep.mubr.f32.mxu0 0.0
    %717 = vmatmul.mubr.f32.gmra.mrb[0].mxu0 %v647
    %v718 = vpop.f32.mrb[0].mxu0
    %v719 = vadd.f32 0.0, %v718
    %v720 = vpop.f32.mrb[0].mxu0
    %721 = vmatprep.mubr.f32.mxu0 0.0
    %722 = vmatmul.mubr.f32.gmra.mrb[0].mxu0 %v650
    %v723 = vpop.f32.mrb[0].mxu0
    %v724 = vadd.f32 0.0, %v723
    %v725 = vpop.f32.mrb[0].mxu0
    %726 = vdwg.mxu0
    %v727 = vld [vmem:[#allocation3 + $0xc8] sm:$0xff]
    %v728 = vld [vmem:[#allocation3 + $0xd0] sm:$0xff]
    %v729 = vld [vmem:[#allocation3 + $0xd8] sm:$0xff]
    %v730 = vld [vmem:[#allocation3 + $0xe0] sm:$0xff]
    %v732 = vsel %vm251, %v719, 0
    %v735 = vsel %vm251, %v724, 0
    %737 = vmatprep.subr.mxu0 0.0
    %738 = vmatpush1.msra.mxu0 %v727
    %739 = vmatprep.subr.mxu0 0.0
    %740 = vmatpush1.msra.mxu0 %v728
    %741 = vmatprep.subr.mxu0 0.0
    %742 = vmatpush1.msra.mxu0 %v729
    %743 = vmatprep.subr.mxu0 0.0
    %744 = vmatpush1.msra.mxu0 %v730
    %745 = vmatprep.subr.mxu0 0.0
    %746 = vmatpush1.msra.mxu0 0.0
    %747 = vmatprep.subr.mxu0 0.0
    %748 = vmatpush1.msra.mxu0 0.0
    %749 = vmatprep.subr.mxu0 0.0
    %750 = vmatpush1.msra.mxu0 0.0
    %751 = vmatprep.subr.mxu0 0.0
    %752 = vmatpush1.msra.mxu0 0.0
    %753 = vmatprep.subr.mxu0 0.0
    %754 = vmatpush1.msra.mxu0 0.0
    %755 = vmatprep.subr.mxu0 0.0
    %756 = vmatpush1.msra.mxu0 0.0
    %757 = vmatprep.subr.mxu0 0.0
    %758 = vmatpush1.msra.mxu0 0.0
    %759 = vmatprep.subr.mxu0 0.0
    %760 = vmatpush1.msra.mxu0 0.0
    %761 = vmatprep.subr.mxu0 0.0
    %762 = vmatpush1.msra.mxu0 0.0
    %763 = vmatprep.subr.mxu0 0.0
    %764 = vmatpush1.msra.mxu0 0.0
    %765 = vmatprep.subr.mxu0 0.0
    %766 = vmatpush1.msra.mxu0 0.0
    %767 = vmatprep.subr.mxu0 0.0
    %768 = vmatpush1.msra.mxu0 0.0
    %769 = vmatprep.subr.mxu0 0.0
    %770 = vmatpush1.msra.mxu0 0.0
    %771 = vmatprep.subr.mxu0 0.0
    %772 = vmatpush1.msra.mxu0 0.0
    %773 = vmatprep.subr.mxu0 0.0
    %774 = vmatpush1.msra.mxu0 0.0
    %775 = vmatprep.subr.mxu0 0.0
    %776 = vmatpush1.msra.mxu0 0.0
    %777 = vmatprep.subr.mxu0 0.0
    %778 = vmatpush1.msra.mxu0 0.0
    %779 = vmatprep.subr.mxu0 0.0
    %780 = vmatpush1.msra.mxu0 0.0
    %781 = vmatprep.subr.mxu0 0.0
    %782 = vmatpush1.msra.mxu0 0.0
    %783 = vmatprep.subr.mxu0 0.0
    %784 = vmatpush1.msra.mxu0 0.0
    %785 = vmatprep.subr.mxu0 0.0
    %786 = vmatpush1.msra.mxu0 0.0
    %787 = vmatprep.subr.mxu0 0.0
    %788 = vmatpush1.msra.mxu0 0.0
    %789 = vmatprep.subr.mxu0 0.0
    %790 = vmatpush1.msra.mxu0 0.0
    %791 = vmatprep.subr.mxu0 0.0
    %792 = vmatpush1.msra.mxu0 0.0
    %793 = vmatprep.subr.mxu0 0.0
    %794 = vmatpush1.msra.mxu0 0.0
    %795 = vmatprep.subr.mxu0 0.0
    %796 = vmatpush1.msra.mxu0 0.0
    %797 = vmatprep.subr.mxu0 0.0
    %798 = vmatpush1.msra.mxu0 0.0
    %799 = vmatprep.subr.mxu0 0.0
    %800 = vmatpush1.msra.mxu0 0.0
    %801 = vmatprep.mubr.f32.mxu0 0.0
    %802 = vmatmul.mubr.f32.gmra.mrb[0].mxu0 %v732
    %v803 = vpop.f32.mrb[0].mxu0
    %v804 = vadd.f32 0.0, %v803
    %v805 = vpop.f32.mrb[0].mxu0
    %806 = vmatprep.mubr.f32.mxu0 0.0
    %807 = vmatmul.mubr.f32.gmra.mrb[0].mxu0 %v735
    %v808 = vpop.f32.mrb[0].mxu0
    %v809 = vadd.f32 0.0, %v808
    %v810 = vpop.f32.mrb[0].mxu0
    %811 = vdwg.mxu0
    %v812 = vadd.f32 %v249, %v804
    %v813 = vadd.f32 %v250, %v809
    %v814 = vld [vmem:[#allocation3 + $0xe8] sm:$0x1]
    %v815 = vlaneseq
    %v816 = vshrl.u32 %v815, 7
    %v817 = vsub.s32 0, %v816
    %v818 = vrot.slane %v814, %v817
    %v819 = vadd.f32 %v812, %v818
    %v820 = vadd.f32 %v813, %v818
    %v821 = vsel %vm251, %v819, 0.0
    %822 = vadd.xlane.f32.xlu0 %v821
    %v823 = vpop.xlane.xlu0 %822
    %v824 = vsel %vm251, %v820, 0.0
    %825 = vadd.xlane.f32.xlu0 %v824
    %v826 = vpop.xlane.xlu0 %825
    %v827 = vmul.f32 %v823, %v258
    %v828 = vmul.f32 %v826, %v258
    %v829 = vsub.f32 %v819, %v827
    %v830 = vsub.f32 %v820, %v828
    %v831 = vmul.f32 %v829, %v829
    %v832 = vmul.f32 %v830, %v830
    %v833 = vsel %vm251, %v831, 0.0
    %834 = vadd.xlane.f32.xlu0 %v833
    %v835 = vpop.xlane.xlu0 %834
    %v836 = vsel %vm251, %v832, 0.0
    %837 = vadd.xlane.f32.xlu0 %v836
    %v838 = vpop.xlane.xlu0 %837
    %v839 = vmul.f32 %v835, %v258
    %v840 = vmul.f32 %v838, %v258
    %v841 = vadd.f32 %v839, 1e-05
    %v842 = vadd.f32 %v840, 1e-05
    %v843 = vrsqrt.pop %v841
    %v844 = vrsqrt.pop %v842
    %v845 = vmul.f32 %v829, %v843
    %v846 = vmul.f32 %v830, %v844
    %v847 = vld [vmem:[#allocation3 + $0xf0] sm:$0xff]
    %v848 = vld [vmem:[#allocation3 + $0xf8] sm:$0xff]
    %v849 = vld [vmem:[#allocation3 + $0x100] sm:$0xff]
    %v850 = vld [vmem:[#allocation3 + $0x108] sm:$0xff]
    %v851 = vld [vmem:[#allocation3 + $0x110] sm:$0x1]
    %v852 = vlaneseq
    %v853 = vshrl.u32 %v852, 7
    %v854 = vsub.s32 0, %v853
    %v855 = vrot.slane %v851, %v854
    %v857 = vsel %vm251, %v845, 0
    %v860 = vsel %vm251, %v846, 0
    %862 = vmatprep.subr.mxu0 0.0
    %863 = vmatpush1.msra.mxu0 %v847
    %864 = vmatprep.subr.mxu0 0.0
    %865 = vmatpush1.msra.mxu0 %v848
    %866 = vmatprep.subr.mxu0 0.0
    %867 = vmatpush1.msra.mxu0 %v849
    %868 = vmatprep.subr.mxu0 0.0
    %869 = vmatpush1.msra.mxu0 %v850
    %870 = vmatprep.subr.mxu0 0.0
    %871 = vmatpush1.msra.mxu0 0.0
    %872 = vmatprep.subr.mxu0 0.0
    %873 = vmatpush1.msra.mxu0 0.0
    %874 = vmatprep.subr.mxu0 0.0
    %875 = vmatpush1.msra.mxu0 0.0
    %876 = vmatprep.subr.mxu0 0.0
    %877 = vmatpush1.msra.mxu0 0.0
    %878 = vmatprep.subr.mxu0 0.0
    %879 = vmatpush1.msra.mxu0 0.0
    %880 = vmatprep.subr.mxu0 0.0
    %881 = vmatpush1.msra.mxu0 0.0
    %882 = vmatprep.subr.mxu0 0.0
    %883 = vmatpush1.msra.mxu0 0.0
    %884 = vmatprep.subr.mxu0 0.0
    %885 = vmatpush1.msra.mxu0 0.0
    %886 = vmatprep.subr.mxu0 0.0
    %887 = vmatpush1.msra.mxu0 0.0
    %888 = vmatprep.subr.mxu0 0.0
    %889 = vmatpush1.msra.mxu0 0.0
    %890 = vmatprep.subr.mxu0 0.0
    %891 = vmatpush1.msra.mxu0 0.0
    %892 = vmatprep.subr.mxu0 0.0
    %893 = vmatpush1.msra.mxu0 0.0
    %894 = vmatprep.subr.mxu0 0.0
    %895 = vmatpush1.msra.mxu0 0.0
    %896 = vmatprep.subr.mxu0 0.0
    %897 = vmatpush1.msra.mxu0 0.0
    %898 = vmatprep.subr.mxu0 0.0
    %899 = vmatpush1.msra.mxu0 0.0
    %900 = vmatprep.subr.mxu0 0.0
    %901 = vmatpush1.msra.mxu0 0.0
    %902 = vmatprep.subr.mxu0 0.0
    %903 = vmatpush1.msra.mxu0 0.0
    %904 = vmatprep.subr.mxu0 0.0
    %905 = vmatpush1.msra.mxu0 0.0
    %906 = vmatprep.subr.mxu0 0.0
    %907 = vmatpush1.msra.mxu0 0.0
    %908 = vmatprep.subr.mxu0 0.0
    %909 = vmatpush1.msra.mxu0 0.0
    %910 = vmatprep.subr.mxu0 0.0
    %911 = vmatpush1.msra.mxu0 0.0
    %912 = vmatprep.subr.mxu0 0.0
    %913 = vmatpush1.msra.mxu0 0.0
    %914 = vmatprep.subr.mxu0 0.0
    %915 = vmatpush1.msra.mxu0 0.0
    %916 = vmatprep.subr.mxu0 0.0
    %917 = vmatpush1.msra.mxu0 0.0
    %918 = vmatprep.subr.mxu0 0.0
    %919 = vmatpush1.msra.mxu0 0.0
    %920 = vmatprep.subr.mxu0 0.0
    %921 = vmatpush1.msra.mxu0 0.0
    %922 = vmatprep.subr.mxu0 0.0
    %923 = vmatpush1.msra.mxu0 0.0
    %924 = vmatprep.subr.mxu0 0.0
    %925 = vmatpush1.msra.mxu0 0.0
    %926 = vmatprep.mubr.f32.mxu0 0.0
    %927 = vmatmul.mubr.f32.gmra.mrb[0].mxu0 %v857
    %v928 = vpop.f32.mrb[0].mxu0
    %v929 = vadd.f32 %v855, %v928
    %v930 = vpop.f32.mrb[0].mxu0
    %931 = vmatprep.mubr.f32.mxu0 0.0
    %932 = vmatmul.mubr.f32.gmra.mrb[0].mxu0 %v860
    %v933 = vpop.f32.mrb[0].mxu0
    %v934 = vadd.f32 %v855, %v933
    %v935 = vpop.f32.mrb[0].mxu0
    %936 = vdwg.mxu0
    %v937 = vmax.f32 %v929, 0.0
    %v938 = vmax.f32 %v934, 0.0
    %v939 = vld [vmem:[#allocation3 + $0x118] sm:$0xff]
    %v940 = vld [vmem:[#allocation3 + $0x120] sm:$0xff]
    %v941 = vld [vmem:[#allocation3 + $0x128] sm:$0xff]
    %v942 = vld [vmem:[#allocation3 + $0x130] sm:$0xff]
    %v943 = vld [vmem:[#allocation3 + $0x138] sm:$0xff]
    %v944 = vld [vmem:[#allocation3 + $0x140] sm:$0xff]
    %v945 = vld [vmem:[#allocation3 + $0x148] sm:$0xff]
    %v946 = vld [vmem:[#allocation3 + $0x150] sm:$0xff]
    %vm947 = vcmask 523264
    %v949 = vsel %vm947, %v937, 0
    %v952 = vsel %vm947, %v938, 0
    %954 = vmatprep.subr.mxu0 0.0
    %955 = vmatpush1.msra.mxu0 %v939
    %956 = vmatprep.subr.mxu0 0.0
    %957 = vmatpush1.msra.mxu0 %v940
    %958 = vmatprep.subr.mxu0 0.0
    %959 = vmatpush1.msra.mxu0 %v941
    %960 = vmatprep.subr.mxu0 0.0
    %961 = vmatpush1.msra.mxu0 %v942
    %962 = vmatprep.subr.mxu0 0.0
    %963 = vmatpush1.msra.mxu0 %v943
    %964 = vmatprep.subr.mxu0 0.0
    %965 = vmatpush1.msra.mxu0 %v944
    %966 = vmatprep.subr.mxu0 0.0
    %967 = vmatpush1.msra.mxu0 %v945
    %968 = vmatprep.subr.mxu0 0.0
    %969 = vmatpush1.msra.mxu0 %v946
    %970 = vmatprep.subr.mxu0 0.0
    %971 = vmatpush1.msra.mxu0 0.0
    %972 = vmatprep.subr.mxu0 0.0
    %973 = vmatpush1.msra.mxu0 0.0
    %974 = vmatprep.subr.mxu0 0.0
    %975 = vmatpush1.msra.mxu0 0.0
    %976 = vmatprep.subr.mxu0 0.0
    %977 = vmatpush1.msra.mxu0 0.0
    %978 = vmatprep.subr.mxu0 0.0
    %979 = vmatpush1.msra.mxu0 0.0
    %980 = vmatprep.subr.mxu0 0.0
    %981 = vmatpush1.msra.mxu0 0.0
    %982 = vmatprep.subr.mxu0 0.0
    %983 = vmatpush1.msra.mxu0 0.0
    %984 = vmatprep.subr.mxu0 0.0
    %985 = vmatpush1.msra.mxu0 0.0
    %986 = vmatprep.subr.mxu0 0.0
    %987 = vmatpush1.msra.mxu0 0.0
    %988 = vmatprep.subr.mxu0 0.0
    %989 = vmatpush1.msra.mxu0 0.0
    %990 = vmatprep.subr.mxu0 0.0
    %991 = vmatpush1.msra.mxu0 0.0
    %992 = vmatprep.subr.mxu0 0.0
    %993 = vmatpush1.msra.mxu0 0.0
    %994 = vmatprep.subr.mxu0 0.0
    %995 = vmatpush1.msra.mxu0 0.0
    %996 = vmatprep.subr.mxu0 0.0
    %997 = vmatpush1.msra.mxu0 0.0
    %998 = vmatprep.subr.mxu0 0.0
    %999 = vmatpush1.msra.mxu0 0.0
    %1000 = vmatprep.subr.mxu0 0.0
    %1001 = vmatpush1.msra.mxu0 0.0
    %1002 = vmatprep.subr.mxu0 0.0
    %1003 = vmatpush1.msra.mxu0 0.0
    %1004 = vmatprep.subr.mxu0 0.0
    %1005 = vmatpush1.msra.mxu0 0.0
    %1006 = vmatprep.subr.mxu0 0.0
    %1007 = vmatpush1.msra.mxu0 0.0
    %1008 = vmatprep.subr.mxu0 0.0
    %1009 = vmatpush1.msra.mxu0 0.0
    %1010 = vmatprep.subr.mxu0 0.0
    %1011 = vmatpush1.msra.mxu0 0.0
    %1012 = vmatprep.subr.mxu0 0.0
    %1013 = vmatpush1.msra.mxu0 0.0
    %1014 = vmatprep.subr.mxu0 0.0
    %1015 = vmatpush1.msra.mxu0 0.0
    %1016 = vmatprep.subr.mxu0 0.0
    %1017 = vmatpush1.msra.mxu0 0.0
    %1018 = vmatprep.mubr.f32.mxu0 0.0
    %1019 = vmatmul.mubr.f32.gmra.mrb[0].mxu0 %v949
    %v1020 = vpop.f32.mrb[0].mxu0
    %v1021 = vadd.f32 0.0, %v1020
    %v1022 = vpop.f32.mrb[0].mxu0
    %1023 = vmatprep.mubr.f32.mxu0 0.0
    %1024 = vmatmul.mubr.f32.gmra.mrb[0].mxu0 %v952
    %v1025 = vpop.f32.mrb[0].mxu0
    %v1026 = vadd.f32 0.0, %v1025
    %v1027 = vpop.f32.mrb[0].mxu0
    %1028 = vdwg.mxu0
    %v1029 = vadd.f32 %v819, %v1021
    %v1030 = vadd.f32 %v820, %v1026
    %v1031 = vld [vmem:[#allocation3 + $0x158] sm:$0x1]
    %v1032 = vlaneseq
    %v1033 = vshrl.u32 %v1032, 7
    %v1034 = vsub.s32 0, %v1033
    %v1035 = vrot.slane %v1031, %v1034
    %v1036 = vadd.f32 %v1029, %v1035
    %v1037 = vadd.f32 %v1030, %v1035
    %v1038 = vsel %vm251, %v1036, 0.0
    %1039 = vadd.xlane.f32.xlu0 %v1038
    %v1040 = vpop.xlane.xlu0 %1039
    %v1041 = vsel %vm251, %v1037, 0.0
    %1042 = vadd.xlane.f32.xlu0 %v1041
    %v1043 = vpop.xlane.xlu0 %1042
    %v1044 = vmul.f32 %v1040, %v258
    %v1045 = vmul.f32 %v1043, %v258
    %v1046 = vsub.f32 %v1036, %v1044
    %v1047 = vsub.f32 %v1037, %v1045
    %v1048 = vmul.f32 %v1046, %v1046
    %v1049 = vmul.f32 %v1047, %v1047
    %v1050 = vsel %vm251, %v1048, 0.0
    %1051 = vadd.xlane.f32.xlu0 %v1050
    %v1052 = vpop.xlane.xlu0 %1051
    %v1053 = vsel %vm251, %v1049, 0.0
    %1054 = vadd.xlane.f32.xlu0 %v1053
    %v1055 = vpop.xlane.xlu0 %1054
    %v1056 = vmul.f32 %v1052, %v258
    %v1057 = vmul.f32 %v1055, %v258
    %v1058 = vadd.f32 %v1056, 1e-05
    %v1059 = vadd.f32 %v1057, 1e-05
    %v1060 = vrsqrt.pop %v1058
    %v1061 = vrsqrt.pop %v1059
    %v1062 = vmul.f32 %v1046, %v1060
    %v1063 = vmul.f32 %v1047, %v1061
    %v1064 = vld [vmem:[#allocation3 + $0x160] sm:$0xff]
    %v1065 = vld [vmem:[#allocation3 + $0x168] sm:$0xff]
    %v1066 = vld [vmem:[#allocation3 + $0x170] sm:$0xff]
    %v1067 = vld [vmem:[#allocation3 + $0x178] sm:$0xff]
    %v1068 = vld [vmem:[#allocation3 + $0x180] sm:$0x1]
    %v1069 = vlaneseq
    %v1070 = vshrl.u32 %v1069, 7
    %v1071 = vsub.s32 0, %v1070
    %v1072 = vrot.slane %v1068, %v1071
    %v1074 = vsel %vm251, %v1062, 0
    %v1077 = vsel %vm251, %v1063, 0
    %1079 = vmatprep.subr.mxu0 0.0
    %1080 = vmatpush1.msra.mxu0 %v1064
    %1081 = vmatprep.subr.mxu0 0.0
    %1082 = vmatpush1.msra.mxu0 %v1065
    %1083 = vmatprep.subr.mxu0 0.0
    %1084 = vmatpush1.msra.mxu0 %v1066
    %1085 = vmatprep.subr.mxu0 0.0
    %1086 = vmatpush1.msra.mxu0 %v1067
    %1087 = vmatprep.subr.mxu0 0.0
    %1088 = vmatpush1.msra.mxu0 0.0
    %1089 = vmatprep.subr.mxu0 0.0
    %1090 = vmatpush1.msra.mxu0 0.0
    %1091 = vmatprep.subr.mxu0 0.0
    %1092 = vmatpush1.msra.mxu0 0.0
    %1093 = vmatprep.subr.mxu0 0.0
    %1094 = vmatpush1.msra.mxu0 0.0
    %1095 = vmatprep.subr.mxu0 0.0
    %1096 = vmatpush1.msra.mxu0 0.0
    %1097 = vmatprep.subr.mxu0 0.0
    %1098 = vmatpush1.msra.mxu0 0.0
    %1099 = vmatprep.subr.mxu0 0.0
    %1100 = vmatpush1.msra.mxu0 0.0
    %1101 = vmatprep.subr.mxu0 0.0
    %1102 = vmatpush1.msra.mxu0 0.0
    %1103 = vmatprep.subr.mxu0 0.0
    %1104 = vmatpush1.msra.mxu0 0.0
    %1105 = vmatprep.subr.mxu0 0.0
    %1106 = vmatpush1.msra.mxu0 0.0
    %1107 = vmatprep.subr.mxu0 0.0
    %1108 = vmatpush1.msra.mxu0 0.0
    %1109 = vmatprep.subr.mxu0 0.0
    %1110 = vmatpush1.msra.mxu0 0.0
    %1111 = vmatprep.subr.mxu0 0.0
    %1112 = vmatpush1.msra.mxu0 0.0
    %1113 = vmatprep.subr.mxu0 0.0
    %1114 = vmatpush1.msra.mxu0 0.0
    %1115 = vmatprep.subr.mxu0 0.0
    %1116 = vmatpush1.msra.mxu0 0.0
    %1117 = vmatprep.subr.mxu0 0.0
    %1118 = vmatpush1.msra.mxu0 0.0
    %1119 = vmatprep.subr.mxu0 0.0
    %1120 = vmatpush1.msra.mxu0 0.0
    %1121 = vmatprep.subr.mxu0 0.0
    %1122 = vmatpush1.msra.mxu0 0.0
    %1123 = vmatprep.subr.mxu0 0.0
    %1124 = vmatpush1.msra.mxu0 0.0
    %1125 = vmatprep.subr.mxu0 0.0
    %1126 = vmatpush1.msra.mxu0 0.0
    %1127 = vmatprep.subr.mxu0 0.0
    %1128 = vmatpush1.msra.mxu0 0.0
    %1129 = vmatprep.subr.mxu0 0.0
    %1130 = vmatpush1.msra.mxu0 0.0
    %1131 = vmatprep.subr.mxu0 0.0
    %1132 = vmatpush1.msra.mxu0 0.0
    %1133 = vmatprep.subr.mxu0 0.0
    %1134 = vmatpush1.msra.mxu0 0.0
    %1135 = vmatprep.subr.mxu0 0.0
    %1136 = vmatpush1.msra.mxu0 0.0
    %1137 = vmatprep.subr.mxu0 0.0
    %1138 = vmatpush1.msra.mxu0 0.0
    %1139 = vmatprep.subr.mxu0 0.0
    %1140 = vmatpush1.msra.mxu0 0.0
    %1141 = vmatprep.subr.mxu0 0.0
    %1142 = vmatpush1.msra.mxu0 0.0
    %1143 = vmatprep.mubr.f32.mxu0 0.0
    %1144 = vmatmul.mubr.f32.gmra.mrb[0].mxu0 %v1074
    %v1145 = vpop.f32.mrb[0].mxu0
    %v1146 = vadd.f32 %v1072, %v1145
    %v1147 = vpop.f32.mrb[0].mxu0
    %1148 = vmatprep.mubr.f32.mxu0 0.0
    %1149 = vmatmul.mubr.f32.gmra.mrb[0].mxu0 %v1077
    %v1150 = vpop.f32.mrb[0].mxu0
    %v1151 = vadd.f32 %v1072, %v1150
    %v1152 = vpop.f32.mrb[0].mxu0
    %1153 = vdwg.mxu0
    %v1154 = vld [vmem:[#allocation3 + $0x188] sm:$0x3]
    %vm1155 = vcmask 15360
    %v1157 = vsel %vm1155, %v1146, 0
    %v1160 = vsel %vm1155, %v1151, 0
    %vm1162 = vcmask 1041408
    %v1164 = vsel %vm1162, %v1154, 0
    %1166 = vmatprep.subr.mxu0 0.0
    %1167 = vmatpush1.msra.mxu0 %v1164
    %1168 = vmatprep.subr.mxu0 0.0
    %1169 = vmatpush1.msra.mxu0 0.0
    %1170 = vmatprep.subr.mxu0 0.0
    %1171 = vmatpush1.msra.mxu0 0.0
    %1172 = vmatprep.subr.mxu0 0.0
    %1173 = vmatpush1.msra.mxu0 0.0
    %1174 = vmatprep.subr.mxu0 0.0
    %1175 = vmatpush1.msra.mxu0 0.0
    %1176 = vmatprep.subr.mxu0 0.0
    %1177 = vmatpush1.msra.mxu0 0.0
    %1178 = vmatprep.subr.mxu0 0.0
    %1179 = vmatpush1.msra.mxu0 0.0
    %1180 = vmatprep.subr.mxu0 0.0
    %1181 = vmatpush1.msra.mxu0 0.0
    %1182 = vmatprep.subr.mxu0 0.0
    %1183 = vmatpush1.msra.mxu0 0.0
    %1184 = vmatprep.subr.mxu0 0.0
    %1185 = vmatpush1.msra.mxu0 0.0
    %1186 = vmatprep.subr.mxu0 0.0
    %1187 = vmatpush1.msra.mxu0 0.0
    %1188 = vmatprep.subr.mxu0 0.0
    %1189 = vmatpush1.msra.mxu0 0.0
    %1190 = vmatprep.subr.mxu0 0.0
    %1191 = vmatpush1.msra.mxu0 0.0
    %1192 = vmatprep.subr.mxu0 0.0
    %1193 = vmatpush1.msra.mxu0 0.0
    %1194 = vmatprep.subr.mxu0 0.0
    %1195 = vmatpush1.msra.mxu0 0.0
    %1196 = vmatprep.subr.mxu0 0.0
    %1197 = vmatpush1.msra.mxu0 0.0
    %1198 = vmatprep.subr.mxu0 0.0
    %1199 = vmatpush1.msra.mxu0 0.0
    %1200 = vmatprep.subr.mxu0 0.0
    %1201 = vmatpush1.msra.mxu0 0.0
    %1202 = vmatprep.subr.mxu0 0.0
    %1203 = vmatpush1.msra.mxu0 0.0
    %1204 = vmatprep.subr.mxu0 0.0
    %1205 = vmatpush1.msra.mxu0 0.0
    %1206 = vmatprep.subr.mxu0 0.0
    %1207 = vmatpush1.msra.mxu0 0.0
    %1208 = vmatprep.subr.mxu0 0.0
    %1209 = vmatpush1.msra.mxu0 0.0
    %1210 = vmatprep.subr.mxu0 0.0
    %1211 = vmatpush1.msra.mxu0 0.0
    %1212 = vmatprep.subr.mxu0 0.0
    %1213 = vmatpush1.msra.mxu0 0.0
    %1214 = vmatprep.subr.mxu0 0.0
    %1215 = vmatpush1.msra.mxu0 0.0
    %1216 = vmatprep.subr.mxu0 0.0
    %1217 = vmatpush1.msra.mxu0 0.0
    %1218 = vmatprep.subr.mxu0 0.0
    %1219 = vmatpush1.msra.mxu0 0.0
    %1220 = vmatprep.subr.mxu0 0.0
    %1221 = vmatpush1.msra.mxu0 0.0
    %1222 = vmatprep.subr.mxu0 0.0
    %1223 = vmatpush1.msra.mxu0 0.0
    %1224 = vmatprep.subr.mxu0 0.0
    %1225 = vmatpush1.msra.mxu0 0.0
    %1226 = vmatprep.subr.mxu0 0.0
    %1227 = vmatpush1.msra.mxu0 0.0
    %1228 = vmatprep.subr.mxu0 0.0
    %1229 = vmatpush1.msra.mxu0 0.0
    %1230 = vmatprep.mubr.f32.mxu0 0.0
    %1231 = vmatmul.mubr.f32.gmra.mrb[0].mxu0 %v1157
    %v1232 = vpop.f32.mrb[0].mxu0
    %v1233 = vadd.f32 0.0, %v1232
    %v1234 = vpop.f32.mrb[0].mxu0
    %1235 = vmatprep.mubr.f32.mxu0 0.0
    %1236 = vmatmul.mubr.f32.gmra.mrb[0].mxu0 %v1160
    %v1237 = vpop.f32.mrb[0].mxu0
    %v1238 = vadd.f32 0.0, %v1237
    %v1239 = vpop.f32.mrb[0].mxu0
    %1240 = vdwg.mxu0
    %v1241 = vlaneseq
    %v1242 = vshrl.u32 %v1241, 7
    %v1243 = vadd.s32 %v1242, 8
    %v1244 = vld [vmem:[#allocation3 + $0x190] sm:$0x1]
    %v1245 = vlaneseq
    %v1246 = vshrl.u32 %v1245, 7
    %v1247 = vsub.s32 0, %v1246
    %v1248 = vrot.slane %v1244, %v1247
    %1250 = vrot.lane.b32.xlu0 %v1248, 32
    %v1251 = vpop.permute.xlu0 %1250
    %v1253 = vadd.f32 %v1233, %v1251
    %v1254 = vadd.f32 %v1238, %v1251
    %v1255 = vrot.slane %v1233, 6
    %v1256 = vrot.slane %v1238, 6
    %vm1257 = vcmp.lt.s32.totalorder %v1242, 2
    %v1258 = vsel %vm1257, %v1255, %v1256
    %v1259 = vsel %vm1257, %v1256, %v1255
    %vm1260 = vcmp.ge.s32.totalorder %v1242, 2
    %vm1261 = vcmp.ge.s32.totalorder %v1243, 2
    %vm1262 = vcmp.lt.s32.totalorder %v1242, 18
    %vm1263 = vcmp.lt.s32.totalorder %v1243, 18
    %vm1264 = vmand %vm1260, %vm1262
    %vm1265 = vmand %vm1261, %vm1263
    %v1266 = vsel %vm1264, %v1259, 0.0
    %v1267 = vsel %vm1265, %v1258, 0.0
    %1270 = vrot.lane.b32.xlu0 %v1266, 32
    %v1271 = vpop.permute.xlu0 %1270
    %1272 = vrot.lane.b32.xlu0 %v1267, 32
    %v1273 = vpop.permute.xlu0 %1272
    %v1276 = vadd.f32 %v1253, %v1271
    %v1277 = vadd.f32 %v1254, %v1273
    %1280 = vrot.lane.b32.xlu0 %v1233, 112
    %v1281 = vpop.permute.xlu0 %1280
    %1282 = vrot.lane.b32.xlu0 %v1238, 112
    %v1283 = vpop.permute.xlu0 %1282
    %v1286 = vrot.slane %v1281, 7
    %v1287 = vrot.slane %v1283, 7
    %vm1288 = vcmp.lt.s32.totalorder %v1242, 1
    %v1289 = vsel %vm1288, %v1286, %v1287
    %v1290 = vsel %vm1288, %v1287, %v1286
    %vm1291 = vcmp.ge.s32.totalorder %v1242, 1
    %vm1292 = vcmp.ge.s32.totalorder %v1243, 1
    %vm1293 = vcmp.lt.s32.totalorder %v1242, 17
    %vm1294 = vcmp.lt.s32.totalorder %v1243, 17
    %vm1295 = vmand %vm1291, %vm1293
    %vm1296 = vmand %vm1292, %vm1294
    %v1297 = vsel %vm1295, %v1290, 0.0
    %v1298 = vsel %vm1296, %v1289, 0.0
    %1301 = vrot.lane.b32.xlu0 %v1297, 32
    %v1302 = vpop.permute.xlu0 %1301
    %1303 = vrot.lane.b32.xlu0 %v1298, 32
    %v1304 = vpop.permute.xlu0 %1303
    %v1307 = vadd.f32 %v1276, %v1302
    %v1308 = vadd.f32 %v1277, %v1304
    %1309 = vrot.lane.b32.xlu0 %v1233, 80
    %v1310 = vpop.permute.xlu0 %1309
    %1311 = vrot.lane.b32.xlu0 %v1238, 80
    %v1312 = vpop.permute.xlu0 %1311
    %v1315 = vrot.slane %v1310, 1
    %v1316 = vrot.slane %v1312, 1
    %vm1317 = vcmp.lt.s32.totalorder %v1242, 7
    %v1318 = vsel %vm1317, %v1315, %v1316
    %v1319 = vsel %vm1317, %v1316, %v1315
    %vm1320 = vcmp.ge.s32.totalorder %v1242, 4294967295
    %vm1321 = vcmp.ge.s32.totalorder %v1243, 4294967295
    %vm1322 = vcmp.lt.s32.totalorder %v1242, 15
    %vm1323 = vcmp.lt.s32.totalorder %v1243, 15
    %vm1324 = vmand %vm1320, %vm1322
    %vm1325 = vmand %vm1321, %vm1323
    %v1326 = vsel %vm1324, %v1318, 0.0
    %v1327 = vsel %vm1325, %v1319, 0.0
    %1330 = vrot.lane.b32.xlu0 %v1326, 32
    %v1331 = vpop.permute.xlu0 %1330
    %1332 = vrot.lane.b32.xlu0 %v1327, 32
    %v1333 = vpop.permute.xlu0 %1332
    %v1336 = vadd.f32 %v1307, %v1331
    %v1337 = vadd.f32 %v1308, %v1333
    %1338 = vrot.lane.b32.xlu0 %v1233, 64
    %v1339 = vpop.permute.xlu0 %1338
    %1340 = vrot.lane.b32.xlu0 %v1238, 64
    %v1341 = vpop.permute.xlu0 %1340
    %v1344 = vrot.slane %v1339, 2
    %v1345 = vrot.slane %v1341, 2
    %vm1346 = vcmp.lt.s32.totalorder %v1242, 6
    %v1347 = vsel %vm1346, %v1344, %v1345
    %v1348 = vsel %vm1346, %v1345, %v1344
    %vm1349 = vcmp.ge.s32.totalorder %v1242, 4294967294
    %vm1350 = vcmp.ge.s32.totalorder %v1243, 4294967294
    %vm1351 = vcmp.lt.s32.totalorder %v1242, 14
    %vm1352 = vcmp.lt.s32.totalorder %v1243, 14
    %vm1353 = vmand %vm1349, %vm1351
    %vm1354 = vmand %vm1350, %vm1352
    %v1355 = vsel %vm1353, %v1347, 0.0
    %v1356 = vsel %vm1354, %v1348, 0.0
    %1359 = vrot.lane.b32.xlu0 %v1355, 32
    %v1360 = vpop.permute.xlu0 %1359
    %1361 = vrot.lane.b32.xlu0 %v1356, 32
    %v1362 = vpop.permute.xlu0 %1361
    %v1365 = vadd.f32 %v1336, %v1360
    %v1366 = vadd.f32 %v1337, %v1362
    %v1367 = vtanh.pop %v1365
    %v1368 = vtanh.pop %v1366
    %v1369 = vld [vmem:[#allocation3 + $0x198] sm:$0xff]
    %v1370 = vld [vmem:[#allocation3 + $0x1a0] sm:$0xff]
    %1373 = vrot.lane.b32.xlu0 %v1367, 96
    %v1374 = vpop.permute.xlu0 %1373
    %1375 = vrot.lane.b32.xlu0 %v1368, 96
    %v1376 = vpop.permute.xlu0 %1375
    %v1377 = vsel %vm164, %v1374, 0
    %v1379 = vsel %vm164, %v1376, 0
    %1381 = vmatprep.subr.mxu0 0.0
    %1382 = vmatpush1.msra.mxu0 %v1369
    %1383 = vmatprep.subr.mxu0 0.0
    %1384 = vmatpush1.msra.mxu0 %v1370
    %1385 = vmatprep.subr.mxu0 0.0
    %1386 = vmatpush1.msra.mxu0 0.0
    %1387 = vmatprep.subr.mxu0 0.0
    %1388 = vmatpush1.msra.mxu0 0.0
    %1389 = vmatprep.subr.mxu0 0.0
    %1390 = vmatpush1.msra.mxu0 0.0
    %1391 = vmatprep.subr.mxu0 0.0
    %1392 = vmatpush1.msra.mxu0 0.0
    %1393 = vmatprep.subr.mxu0 0.0
    %1394 = vmatpush1.msra.mxu0 0.0
    %1395 = vmatprep.subr.mxu0 0.0
    %1396 = vmatpush1.msra.mxu0 0.0
    %1397 = vmatprep.subr.mxu0 0.0
    %1398 = vmatpush1.msra.mxu0 0.0
    %1399 = vmatprep.subr.mxu0 0.0
    %1400 = vmatpush1.msra.mxu0 0.0
    %1401 = vmatprep.subr.mxu0 0.0
    %1402 = vmatpush1.msra.mxu0 0.0
    %1403 = vmatprep.subr.mxu0 0.0
    %1404 = vmatpush1.msra.mxu0 0.0
    %1405 = vmatprep.subr.mxu0 0.0
    %1406 = vmatpush1.msra.mxu0 0.0
    %1407 = vmatprep.subr.mxu0 0.0
    %1408 = vmatpush1.msra.mxu0 0.0
    %1409 = vmatprep.subr.mxu0 0.0
    %1410 = vmatpush1.msra.mxu0 0.0
    %1411 = vmatprep.subr.mxu0 0.0
    %1412 = vmatpush1.msra.mxu0 0.0
    %1413 = vmatprep.subr.mxu0 0.0
    %1414 = vmatpush1.msra.mxu0 0.0
    %1415 = vmatprep.subr.mxu0 0.0
    %1416 = vmatpush1.msra.mxu0 0.0
    %1417 = vmatprep.subr.mxu0 0.0
    %1418 = vmatpush1.msra.mxu0 0.0
    %1419 = vmatprep.subr.mxu0 0.0
    %1420 = vmatpush1.msra.mxu0 0.0
    %1421 = vmatprep.subr.mxu0 0.0
    %1422 = vmatpush1.msra.mxu0 0.0
    %1423 = vmatprep.subr.mxu0 0.0
    %1424 = vmatpush1.msra.mxu0 0.0
    %1425 = vmatprep.subr.mxu0 0.0
    %1426 = vmatpush1.msra.mxu0 0.0
    %1427 = vmatprep.subr.mxu0 0.0
    %1428 = vmatpush1.msra.mxu0 0.0
    %1429 = vmatprep.subr.mxu0 0.0
    %1430 = vmatpush1.msra.mxu0 0.0
    %1431 = vmatprep.subr.mxu0 0.0
    %1432 = vmatpush1.msra.mxu0 0.0
    %1433 = vmatprep.subr.mxu0 0.0
    %1434 = vmatpush1.msra.mxu0 0.0
    %1435 = vmatprep.subr.mxu0 0.0
    %1436 = vmatpush1.msra.mxu0 0.0
    %1437 = vmatprep.subr.mxu0 0.0
    %1438 = vmatpush1.msra.mxu0 0.0
    %1439 = vmatprep.subr.mxu0 0.0
    %1440 = vmatpush1.msra.mxu0 0.0
    %1441 = vmatprep.subr.mxu0 0.0
    %1442 = vmatpush1.msra.mxu0 0.0
    %1443 = vmatprep.subr.mxu0 0.0
    %1444 = vmatpush1.msra.mxu0 0.0
    %1445 = vmatprep.mubr.f32.mxu0 0.0
    %1446 = vmatmul.mubr.f32.gmra.mrb[0].mxu0 %v1377
    %v1447 = vpop.f32.mrb[0].mxu0
    %v1448 = vadd.f32 0.0, %v1447
    %v1449 = vpop.f32.mrb[0].mxu0
    %1450 = vmatprep.mubr.f32.mxu0 0.0
    %1451 = vmatmul.mubr.f32.gmra.mrb[0].mxu0 %v1379
    %v1452 = vpop.f32.mrb[0].mxu0
    %v1453 = vadd.f32 0.0, %v1452
    %v1454 = vpop.f32.mrb[0].mxu0
    %1455 = vdwg.mxu0
    %v1456 = vld [vmem:[#allocation3 + $0x1a8] sm:$0x1]
    %v1457 = vlaneseq
    %v1458 = vshrl.u32 %v1457, 7
    %v1459 = vsub.s32 0, %v1458
    %v1460 = vrot.slane %v1456, %v1459
    %1462 = vrot.lane.b32.xlu0 %v1460, 32
    %v1463 = vpop.permute.xlu0 %1462
    %v1465 = vadd.f32 %v1448, %v1463
    %v1466 = vadd.f32 %v1453, %v1463
    %v1467 = vrot.slane %v1448, 6
    %v1468 = vrot.slane %v1453, 6
    %v1469 = vsel %vm1257, %v1467, %v1468
    %v1470 = vsel %vm1257, %v1468, %v1467
    %v1471 = vsel %vm1264, %v1470, 0.0
    %v1472 = vsel %vm1265, %v1469, 0.0
    %1475 = vrot.lane.b32.xlu0 %v1471, 32
    %v1476 = vpop.permute.xlu0 %1475
    %1477 = vrot.lane.b32.xlu0 %v1472, 32
    %v1478 = vpop.permute.xlu0 %1477
    %v1481 = vadd.f32 %v1465, %v1476
    %v1482 = vadd.f32 %v1466, %v1478
    %1485 = vrot.lane.b32.xlu0 %v1448, 112
    %v1486 = vpop.permute.xlu0 %1485
    %1487 = vrot.lane.b32.xlu0 %v1453, 112
    %v1488 = vpop.permute.xlu0 %1487
    %v1491 = vrot.slane %v1486, 7
    %v1492 = vrot.slane %v1488, 7
    %v1493 = vsel %vm1288, %v1491, %v1492
    %v1494 = vsel %vm1288, %v1492, %v1491
    %v1495 = vsel %vm1295, %v1494, 0.0
    %v1496 = vsel %vm1296, %v1493, 0.0
    %1499 = vrot.lane.b32.xlu0 %v1495, 32
    %v1500 = vpop.permute.xlu0 %1499
    %1501 = vrot.lane.b32.xlu0 %v1496, 32
    %v1502 = vpop.permute.xlu0 %1501
    %v1505 = vadd.f32 %v1481, %v1500
    %v1506 = vadd.f32 %v1482, %v1502
    %1507 = vrot.lane.b32.xlu0 %v1448, 80
    %v1508 = vpop.permute.xlu0 %1507
    %1509 = vrot.lane.b32.xlu0 %v1453, 80
    %v1510 = vpop.permute.xlu0 %1509
    %v1513 = vrot.slane %v1508, 1
    %v1514 = vrot.slane %v1510, 1
    %v1515 = vsel %vm1317, %v1513, %v1514
    %v1516 = vsel %vm1317, %v1514, %v1513
    %v1517 = vsel %vm1324, %v1515, 0.0
    %v1518 = vsel %vm1325, %v1516, 0.0
    %1521 = vrot.lane.b32.xlu0 %v1517, 32
    %v1522 = vpop.permute.xlu0 %1521
    %1523 = vrot.lane.b32.xlu0 %v1518, 32
    %v1524 = vpop.permute.xlu0 %1523
    %v1527 = vadd.f32 %v1505, %v1522
    %v1528 = vadd.f32 %v1506, %v1524
    %1529 = vrot.lane.b32.xlu0 %v1448, 64
    %v1530 = vpop.permute.xlu0 %1529
    %1531 = vrot.lane.b32.xlu0 %v1453, 64
    %v1532 = vpop.permute.xlu0 %1531
    %v1535 = vrot.slane %v1530, 2
    %v1536 = vrot.slane %v1532, 2
    %v1537 = vsel %vm1346, %v1535, %v1536
    %v1538 = vsel %vm1346, %v1536, %v1535
    %v1539 = vsel %vm1353, %v1537, 0.0
    %v1540 = vsel %vm1354, %v1538, 0.0
    %1543 = vrot.lane.b32.xlu0 %v1539, 32
    %v1544 = vpop.permute.xlu0 %1543
    %1545 = vrot.lane.b32.xlu0 %v1540, 32
    %v1546 = vpop.permute.xlu0 %1545
    %v1549 = vadd.f32 %v1527, %v1544
    %v1550 = vadd.f32 %v1528, %v1546
    %v1551 = vtanh.pop %v1549
    %v1552 = vtanh.pop %v1550
    %v1553 = vld [vmem:[#allocation3 + $0x1b0] sm:$0xff]
    %v1554 = vld [vmem:[#allocation3 + $0x1b8] sm:$0xff]
    %1557 = vrot.lane.b32.xlu0 %v1551, 96
    %v1558 = vpop.permute.xlu0 %1557
    %1559 = vrot.lane.b32.xlu0 %v1552, 96
    %v1560 = vpop.permute.xlu0 %1559
    %v1561 = vsel %vm164, %v1558, 0
    %v1563 = vsel %vm164, %v1560, 0
    %1565 = vmatprep.subr.mxu0 0.0
    %1566 = vmatpush1.msra.mxu0 %v1553
    %1567 = vmatprep.subr.mxu0 0.0
    %1568 = vmatpush1.msra.mxu0 %v1554
    %1569 = vmatprep.subr.mxu0 0.0
    %1570 = vmatpush1.msra.mxu0 0.0
    %1571 = vmatprep.subr.mxu0 0.0
    %1572 = vmatpush1.msra.mxu0 0.0
    %1573 = vmatprep.subr.mxu0 0.0
    %1574 = vmatpush1.msra.mxu0 0.0
    %1575 = vmatprep.subr.mxu0 0.0
    %1576 = vmatpush1.msra.mxu0 0.0
    %1577 = vmatprep.subr.mxu0 0.0
    %1578 = vmatpush1.msra.mxu0 0.0
    %1579 = vmatprep.subr.mxu0 0.0
    %1580 = vmatpush1.msra.mxu0 0.0
    %1581 = vmatprep.subr.mxu0 0.0
    %1582 = vmatpush1.msra.mxu0 0.0
    %1583 = vmatprep.subr.mxu0 0.0
    %1584 = vmatpush1.msra.mxu0 0.0
    %1585 = vmatprep.subr.mxu0 0.0
    %1586 = vmatpush1.msra.mxu0 0.0
    %1587 = vmatprep.subr.mxu0 0.0
    %1588 = vmatpush1.msra.mxu0 0.0
    %1589 = vmatprep.subr.mxu0 0.0
    %1590 = vmatpush1.msra.mxu0 0.0
    %1591 = vmatprep.subr.mxu0 0.0
    %1592 = vmatpush1.msra.mxu0 0.0
    %1593 = vmatprep.subr.mxu0 0.0
    %1594 = vmatpush1.msra.mxu0 0.0
    %1595 = vmatprep.subr.mxu0 0.0
    %1596 = vmatpush1.msra.mxu0 0.0
    %1597 = vmatprep.subr.mxu0 0.0
    %1598 = vmatpush1.msra.mxu0 0.0
    %1599 = vmatprep.subr.mxu0 0.0
    %1600 = vmatpush1.msra.mxu0 0.0
    %1601 = vmatprep.subr.mxu0 0.0
    %1602 = vmatpush1.msra.mxu0 0.0
    %1603 = vmatprep.subr.mxu0 0.0
    %1604 = vmatpush1.msra.mxu0 0.0
    %1605 = vmatprep.subr.mxu0 0.0
    %1606 = vmatpush1.msra.mxu0 0.0
    %1607 = vmatprep.subr.mxu0 0.0
    %1608 = vmatpush1.msra.mxu0 0.0
    %1609 = vmatprep.subr.mxu0 0.0
    %1610 = vmatpush1.msra.mxu0 0.0
    %1611 = vmatprep.subr.mxu0 0.0
    %1612 = vmatpush1.msra.mxu0 0.0
    %1613 = vmatprep.subr.mxu0 0.0
    %1614 = vmatpush1.msra.mxu0 0.0
    %1615 = vmatprep.subr.mxu0 0.0
    %1616 = vmatpush1.msra.mxu0 0.0
    %1617 = vmatprep.subr.mxu0 0.0
    %1618 = vmatpush1.msra.mxu0 0.0
    %1619 = vmatprep.subr.mxu0 0.0
    %1620 = vmatpush1.msra.mxu0 0.0
    %1621 = vmatprep.subr.mxu0 0.0
    %1622 = vmatpush1.msra.mxu0 0.0
    %1623 = vmatprep.subr.mxu0 0.0
    %1624 = vmatpush1.msra.mxu0 0.0
    %1625 = vmatprep.subr.mxu0 0.0
    %1626 = vmatpush1.msra.mxu0 0.0
    %1627 = vmatprep.subr.mxu0 0.0
    %1628 = vmatpush1.msra.mxu0 0.0
    %1629 = vmatprep.mubr.f32.mxu0 0.0
    %1630 = vmatmul.mubr.f32.gmra.mrb[0].mxu0 %v1561
    %v1631 = vpop.f32.mrb[0].mxu0
    %v1632 = vadd.f32 0.0, %v1631
    %v1633 = vpop.f32.mrb[0].mxu0
    %1634 = vmatprep.mubr.f32.mxu0 0.0
    %1635 = vmatmul.mubr.f32.gmra.mrb[0].mxu0 %v1563
    %v1636 = vpop.f32.mrb[0].mxu0
    %v1637 = vadd.f32 0.0, %v1636
    %v1638 = vpop.f32.mrb[0].mxu0
    %1639 = vdwg.mxu0
    %v1640 = vld [vmem:[#allocation3 + $0x1c0] sm:$0x1]
    %v1641 = vlaneseq
    %v1642 = vshrl.u32 %v1641, 7
    %v1643 = vsub.s32 0, %v1642
    %v1644 = vrot.slane %v1640, %v1643
    %1646 = vrot.lane.b32.xlu0 %v1644, 4
    %v1647 = vpop.permute.xlu0 %1646
    %v1649 = vadd.f32 %v1632, %v1647
    %v1650 = vadd.f32 %v1637, %v1647
    %v1651 = vrot.slane %v1632, 6
    %v1652 = vrot.slane %v1637, 6
    %v1653 = vsel %vm1257, %v1651, %v1652
    %v1654 = vsel %vm1257, %v1652, %v1651
    %v1655 = vsel %vm1264, %v1654, 0.0
    %v1656 = vsel %vm1265, %v1653, 0.0
    %1659 = vrot.lane.b32.xlu0 %v1655, 4
    %v1660 = vpop.permute.xlu0 %1659
    %1661 = vrot.lane.b32.xlu0 %v1656, 4
    %v1662 = vpop.permute.xlu0 %1661
    %v1665 = vadd.f32 %v1649, %v1660
    %v1666 = vadd.f32 %v1650, %v1662
    %1669 = vrot.lane.b32.xlu0 %v1632, 126
    %v1670 = vpop.permute.xlu0 %1669
    %1671 = vrot.lane.b32.xlu0 %v1637, 126
    %v1672 = vpop.permute.xlu0 %1671
    %v1675 = vrot.slane %v1670, 7
    %v1676 = vrot.slane %v1672, 7
    %v1677 = vsel %vm1288, %v1675, %v1676
    %v1678 = vsel %vm1288, %v1676, %v1675
    %v1679 = vsel %vm1295, %v1678, 0.0
    %v1680 = vsel %vm1296, %v1677, 0.0
    %1683 = vrot.lane.b32.xlu0 %v1679, 4
    %v1684 = vpop.permute.xlu0 %1683
    %1685 = vrot.lane.b32.xlu0 %v1680, 4
    %v1686 = vpop.permute.xlu0 %1685
    %v1689 = vadd.f32 %v1665, %v1684
    %v1690 = vadd.f32 %v1666, %v1686
    %1691 = vrot.lane.b32.xlu0 %v1632, 122
    %v1692 = vpop.permute.xlu0 %1691
    %1693 = vrot.lane.b32.xlu0 %v1637, 122
    %v1694 = vpop.permute.xlu0 %1693
    %v1697 = vrot.slane %v1692, 1
    %v1698 = vrot.slane %v1694, 1
    %v1699 = vsel %vm1317, %v1697, %v1698
    %v1700 = vsel %vm1317, %v1698, %v1697
    %v1701 = vsel %vm1324, %v1699, 0.0
    %v1702 = vsel %vm1325, %v1700, 0.0
    %1705 = vrot.lane.b32.xlu0 %v1701, 4
    %v1706 = vpop.permute.xlu0 %1705
    %1707 = vrot.lane.b32.xlu0 %v1702, 4
    %v1708 = vpop.permute.xlu0 %1707
    %v1711 = vadd.f32 %v1689, %v1706
    %v1712 = vadd.f32 %v1690, %v1708
    %1713 = vrot.lane.b32.xlu0 %v1632, 120
    %v1714 = vpop.permute.xlu0 %1713
    %1715 = vrot.lane.b32.xlu0 %v1637, 120
    %v1716 = vpop.permute.xlu0 %1715
    %v1719 = vrot.slane %v1714, 2
    %v1720 = vrot.slane %v1716, 2
    %v1721 = vsel %vm1346, %v1719, %v1720
    %v1722 = vsel %vm1346, %v1720, %v1719
    %v1723 = vsel %vm1353, %v1721, 0.0
    %v1724 = vsel %vm1354, %v1722, 0.0
    %1727 = vrot.lane.b32.xlu0 %v1723, 4
    %v1728 = vpop.permute.xlu0 %1727
    %1729 = vrot.lane.b32.xlu0 %v1724, 4
    %v1730 = vpop.permute.xlu0 %1729
    %v1733 = vadd.f32 %v1711, %v1728
    %v1734 = vadd.f32 %v1712, %v1730
    %1737 = vrot.lane.b32.xlu0 %v1733, 124
    %v1738 = vpop.permute.xlu0 %1737
    %1739 = vrot.lane.b32.xlu0 %v1734, 124
    %v1740 = vpop.permute.xlu0 %1739
    %v1743 = vadd.f32 %v1146, %v1738
    %v1744 = vadd.f32 %v1151, %v1740
    %1745 = vst.msk [vmem:[%s4] sm:$0xff] %vm1155, %v1743
    %1746 = vst.msk [vmem:[%s4 + $0x8] sm:$0xff] %vm1155, %v1744
    // Predicated region
    $region22: #{yukarin_sosf_forward.1} parent=1 // pred_check
      _
    $region23: #{yukarin_sosf_forward.1} parent=1 // pred_check_branch
      %1748 = sbr.rel (0) target = $region25
    $region24: #{yukarin_sosf_forward.1} parent=1 // pred_region
      _
    $region25: #{yukarin_sosf_forward.1} parent=1 // pred_fallthru
      _
    // Predicated region
    $region26: #{yukarin_sosf_forward.1} parent=1 // pred_check
      _
    $region27: #{yukarin_sosf_forward.1} parent=1 // pred_check_branch
      %1750 = sbr.rel (0) target = $region29
    $region28: #{yukarin_sosf_forward.1} parent=1 // pred_region
      _
    $region29: #{yukarin_sosf_forward.1} parent=1 // pred_fallthru
      _
    %1751 = vsyncpa [#allocation4], 1

</llo_original>
